<compile_context>
chip_gen: v6e
topology: v6e:2x2x1
jax: 0.10.0
libtpu: 0.0.40
codegen_flags: <defaults>
</compile_context>

<pallas_src>
import numpy as np
import jax
import jax.numpy as jnp
from jax.experimental import pallas as pl
from jax.experimental.pallas import tpu as pltpu

GKSIZE = 5
GKSTD = 0.1
PAD = (GKSIZE - 1) // 2


def _gaussian_1d(m, std):
    # scipy.signal.gaussian(M, std): exp(-0.5 * ((n - (M-1)/2) / std)**2)
    n = np.arange(m, dtype=np.float64) - (m - 1) / 2.0
    return np.exp(-0.5 * (n / std) ** 2)


def make_gauss_weight():
    """Deterministic 3-D weight exactly as in GaussKernel.__init__ (reference only)."""
    g1 = _gaussian_1d(GKSIZE, GKSTD)
    gk = np.outer(g1, np.outer(g1, g1)).reshape((GKSIZE, GKSIZE, GKSIZE))
    gk = gk / np.sum(gk)
    return gk  # float64 (5, 5, 5)


def _band_matrix(n, taps):
    """Band matrix B with B[i, o] = taps[i - o + PAD] (|i - o| <= PAD).

    For a 1-D cross-correlation with "same" zero padding: conv(x) == x @ B.
    """
    b = np.zeros((n, n), dtype=np.float64)
    for i in range(n):
        for o in range(max(0, i - PAD), min(n, i + PAD + 1)):
            b[i, o] = taps[i - o + PAD]
    return b


def make_band_matrices(d, h, w):
    """Fused H/W band matrix (H*W, H*W) and transposed D band matrix (D, D)."""
    g1 = _gaussian_1d(GKSIZE, GKSTD)
    gn = g1 / np.sum(g1)  # normalized separable 1-D factor (gn⊗gn⊗gn == gk/sum(gk))
    bh = _band_matrix(h, gn)
    bw = _band_matrix(w, gn)
    bd = _band_matrix(d, gn)
    # kron(BH, BW)[(h*W + w), (h'*W + w')] = BH[h,h'] * BW[w,w']  -> matches the
    # row-major (H, W) -> H*W flattening of the volume slab.
    bhw = np.kron(bh, bw)
    bdt = bd.T  # D pass is applied from the left: out = BD^T @ y
    return (jnp.asarray(bhw, dtype=jnp.float32),
            jnp.asarray(bdt, dtype=jnp.float32))


def _gauss_sep_kernel(bhw_ref, bdt_ref, x_ref, o_ref):
    """One batch element per grid step.

    bhw_ref: (H*W, H*W) f32  fused H/W band matrix (constant across steps)
    bdt_ref: (D, D)     f32  transposed D band matrix (constant across steps)
    x_ref:   (1, D, H*W) f32 input volume slab
    o_ref:   (1, D, H*W) f32 output volume slab (lane-dense last axis)
    """
    x2d = x_ref[0]  # (D, H*W)
    # Fused H + W passes: one MXU matmul, band matrix embeds the zero padding.
    y = jnp.dot(x2d, bhw_ref[...],
                preferred_element_type=jnp.float32,
                precision=jax.lax.Precision.HIGHEST)
    # D pass: second MXU matmul, contraction over D from the left.
    out = jnp.dot(bdt_ref[...], y,
                  preferred_element_type=jnp.float32,
                  precision=jax.lax.Precision.HIGHEST)
    o_ref[0] = out.astype(o_ref.dtype)


def gauss_kernel_forward(x):
    """x: (N, 1, D, H, W) f32 -> (N, 1, D, H, W); == F.conv3d(x, gauss, padding=2)."""
    N, C, D, H, W = x.shape
    assert C == 1, "GaussKernel weight is (1,1,k,k,k) -> single input channel"
    bhw, bdt = make_band_matrices(D, H, W)
    x3 = x.reshape(N, D, H * W)  # lane-dense layout; contiguous reshape is free

    out = pl.pallas_call(
        _gauss_sep_kernel,
        out_shape=jax.ShapeDtypeStruct((N, D, H * W), x.dtype),
        grid=(N,),
        in_specs=[
            pl.BlockSpec((H * W, H * W), lambda n: (0, 0)),   # B_HW, resident
            pl.BlockSpec((D, D), lambda n: (0, 0)),            # B_D^T, resident
            pl.BlockSpec((1, D, H * W), lambda n: (n, 0, 0)),  # volume slab
        ],
        out_specs=pl.BlockSpec((1, D, H * W), lambda n: (n, 0, 0)),
        compiler_params=pltpu.CompilerParams(
            dimension_semantics=("parallel",)),
    )(bhw, bdt, x3)
    return out.reshape(N, 1, D, H, W)


def _reference_conv3d_np(x, weight):
    """float64 numpy ground truth: F.conv3d(x, weight[None,None], padding=2)."""
    xn = np.asarray(x, dtype=np.float64)[:, 0]
    wn = np.asarray(weight, dtype=np.float64)
    N, D, H, W = xn.shape
    xp = np.pad(xn, ((0, 0), (PAD, PAD), (PAD, PAD), (PAD, PAD)))
    out = np.zeros((N, D, H, W), dtype=np.float64)
    for kd in range(GKSIZE):
        for kh in range(GKSIZE):
            for kw in range(GKSIZE):
                out += wn[kd, kh, kw] * xp[:, kd:kd + D, kh:kh + H, kw:kw + W]
    return out[:, None]


if __name__ == "__main__":
    key = jax.random.PRNGKey(0)
    N, C, D, H, W = 2, 1, 16, 16, 16
    x = jax.random.normal(key, (N, C, D, H, W), dtype=jnp.float32)

    out = jax.block_until_ready(gauss_kernel_forward(x))

    ref = _reference_conv3d_np(x, make_gauss_weight())
    np.testing.assert_allclose(np.asarray(out), ref, rtol=1e-5, atol=1e-5)
    print("KERNEL_OK")
</pallas_src>

<mosaic_0001>
module attributes {stable_mosaic.version = 11 : i64} {
  func.func @_gauss_sep_kernel(%arg0: i32, %arg1: memref<256x256xf32, #tpu.memory_space<vmem>>, %arg2: memref<16x16xf32, #tpu.memory_space<vmem>>, %arg3: memref<1x16x256xf32, #tpu.memory_space<vmem>>, %arg4: memref<1x16x256xf32, #tpu.memory_space<vmem>>) attributes {dimension_semantics = [#tpu.dimension_semantics<parallel>], iteration_bounds = array<i64: 2>, scalar_prefetch = 0 : i64, scratch_operands = 0 : i64, tpu.core_type = #tpu.core_type<tc>, window_params = [{pipeline_mode = #tpu.pipeline_mode<synchronous>, transform_indices = @transform_0, window_bounds = array<i64: 256, 256>}, {pipeline_mode = #tpu.pipeline_mode<synchronous>, transform_indices = @transform_1, window_bounds = array<i64: 16, 16>}, {transform_indices = @transform_2, window_bounds = array<i64: 1, 16, 256>}, {transform_indices = @transform_3, window_bounds = array<i64: 1, 16, 256>}]} {
    %c0 = arith.constant 0 : index
    %c0_0 = arith.constant 0 : index
    %c0_1 = arith.constant 0 : index
    %0 = vector.load %arg3[%c0, %c0_0, %c0_1] : memref<1x16x256xf32, #tpu.memory_space<vmem>>, vector<1x16x256xf32>
    %1 = vector.shape_cast %0 : vector<1x16x256xf32> to vector<16x256xf32>
    %c0_2 = arith.constant 0 : index
    %c0_3 = arith.constant 0 : index
    %2 = vector.load %arg1[%c0_2, %c0_3] : memref<256x256xf32, #tpu.memory_space<vmem>>, vector<256x256xf32>
    %cst = arith.constant dense<0.000000e+00> : vector<16x256xf32>
    %3 = tpu.matmul %1, %2, %cst {dimension_numbers = #tpu.dot_dimension_numbers<[1], [0], [0], [1], [0, 0, 1, 1], [], []>, precision = #tpu.contract_precision<fp32>} : vector<16x256xf32>, vector<256x256xf32>, vector<16x256xf32> -> vector<16x256xf32>
    %c0_4 = arith.constant 0 : index
    %c0_5 = arith.constant 0 : index
    %4 = vector.load %arg2[%c0_4, %c0_5] : memref<16x16xf32, #tpu.memory_space<vmem>>, vector<16x16xf32>
    %cst_6 = arith.constant dense<0.000000e+00> : vector<16x256xf32>
    %5 = tpu.matmul %4, %3, %cst_6 {dimension_numbers = #tpu.dot_dimension_numbers<[1], [0], [0], [1], [0, 0, 1, 1], [], []>, precision = #tpu.contract_precision<fp32>} : vector<16x16xf32>, vector<16x256xf32>, vector<16x256xf32> -> vector<16x256xf32>
    %c0_7 = arith.constant 0 : index
    %c0_8 = arith.constant 0 : index
    %c0_9 = arith.constant 0 : index
    %6 = vector.load %arg4[%c0_7, %c0_8, %c0_9] : memref<1x16x256xf32, #tpu.memory_space<vmem>>, vector<1x16x256xf32>
    %7 = vector.shape_cast %6 : vector<1x16x256xf32> to vector<16x256xf32>
    %8 = vector.shape_cast %5 : vector<16x256xf32> to vector<1x16x256xf32>
    tpu.vector_store %arg4[%c0_7, %c0_8, %c0_9], %8 {strides = array<i32>} : memref<1x16x256xf32, #tpu.memory_space<vmem>>, vector<1x16x256xf32>,
    return
  }
  func.func @transform_0(%arg0: i32) -> (i32, i32) {
    %c0_i32 = arith.constant 0 : i32
    %c0_i32_0 = arith.constant 0 : i32
    %c0_i32_1 = arith.constant 0 : i32
    return %c0_i32, %c0_i32_0 : i32, i32
  }
  func.func @transform_1(%arg0: i32) -> (i32, i32) {
    %c0_i32 = arith.constant 0 : i32
    %c0_i32_0 = arith.constant 0 : i32
    %c0_i32_1 = arith.constant 0 : i32
    return %c0_i32, %c0_i32_0 : i32, i32
  }
  func.func @transform_2(%arg0: i32) -> (i32, i32, i32) {
    %c0_i32 = arith.constant 0 : i32
    %c0_i32_0 = arith.constant 0 : i32
    %c0_i32_1 = arith.constant 0 : i32
    return %arg0, %c0_i32, %c0_i32_0 : i32, i32, i32
  }
  func.func @transform_3(%arg0: i32) -> (i32, i32, i32) {
    %c0_i32 = arith.constant 0 : i32
    %c0_i32_0 = arith.constant 0 : i32
    %c0_i32_1 = arith.constant 0 : i32
    return %arg0, %c0_i32, %c0_i32_0 : i32, i32, i32
  }
}

</mosaic_0001>

<llo_original>
// kernel: tpu_custom_call.1
$region0: #{tpu_custom_call.1}
  #allocation0 [shape = 'u32[]', space=smem, size = 0x4, offset = 0x4, fixed_abs, tag = 'smem constant byte address 0x4 - core index']
  #allocation1 [shape = 'u32[144,128]{1,0:T(1,128)}', space=vmem, size = 0x12000, scoped, tag = 'internal scratch']
  %s0 = inlined_call_operand.hbm [shape: f32[256,256], index: 0, kind: input, shape index: {}]
  %s1 = inlined_call_operand.hbm [shape: f32[16,16], index: 1, kind: input, shape index: {}]
  %s2 = inlined_call_operand.hbm [shape: f32[2,16,256], index: 2, kind: input, shape index: {}]
  %s3 = inlined_call_operand.hbm [shape: f32[2,16,256], index: 3, kind: output, shape index: {}]
  %s4 = sld [smem:[#allocation0]]
  $region57: #{tpu_custom_call.1} parent=0
    _
  %s6 = ssub.s32 1, %s4
  %s7 = scalar_select 0, %s6, %s4
  $region1: #{tpu_custom_call.1} parent=0
    #allocation2 [shape = 'u8[262144]{0}', space=vmem, size = 0x40000, scoped, tag = 'input window, operand 0, single buffered']
    #allocation3 [shape = 's32[2]{0}', space=sflag, size = 0x8, scoped, tag = 'scoped memory for tpu_custom_call.1']
    #allocation4 [shape = 's32[2]{0}', space=sflag, size = 0x8, scoped, tag = 'scoped memory for tpu_custom_call.1']
    #allocation5 [shape = 'u8[8192]{0}', space=vmem, size = 0x2000, scoped, tag = 'input window, operand 1, single buffered']
    #allocation6 [shape = 's32[1]{0}', space=sflag, size = 0x4, scoped, tag = 'scoped memory for tpu_custom_call.1']
    #allocation7 [shape = 'u8[32768]{0}', space=vmem, size = 0x8000, scoped, tag = 'input window, operand 2']
    #allocation8 [shape = 'u8[32768]{0}', space=vmem, size = 0x8000, scoped, tag = 'output window, operand 0']
    %8 = vsyncpa [#allocation3], 0
    %9 = vsyncpa [#allocation6], 0
    %10 = vsyncpa [#allocation4], 0
    %s11 = scalar_lea.sflag [#allocation4], 1
    %12 = vsyncpa %s11, 0
    loop: start=0, step=1, limit=4
    $region2: #{tpu_custom_call.1} parent=1 // loop_pre_header
      _
    $region3: #{tpu_custom_call.1} parent=1 // loop_header
      %s14 = sphi 0, %s18
      %p15 = scmp.ge.s32.totalorder %s14, 4
      %s22 = sphi 0, %s22
      %s24 = sphi 0, %s22
      %s25 = sphi 0, %s24
      %s39 = sphi 0, %s25
      %s43 = sphi 0, %s43
      %s45 = sphi 0, %s43
      %s46 = sphi 0, %s45
      %s60 = sphi 0, %s46
      %s66 = sphi 0, %s68
      %s69 = sphi 0, %s66
      %s70 = sphi 0, %s69
      %s86 = sphi 0, %s70
      %s92 = sphi 0, %s94
      %s95 = sphi 0, %s92
      %s96 = sphi 0, %s95
      %s112 = sphi 0, %s96
    $region4: #{tpu_custom_call.1} parent=1 // loop_header_branch
      %17 = sbr.rel (%p15) target = $region8
    $region5: #{tpu_custom_call.1} parent=1 // loop_body
      %s19 = ssub.s32 %s14, 1
      %s20 = ssub.s32 %s14, 2
      %s21 = sadd.s32 %s14, 1
      %s23 = sadd.s32 %s22, 1
      %p26 = scmp.eq.s32.totalorder %s14, 1
      %p27 = scmp.ne.s32.totalorder %s22, %s24
      %p28 = scmp.eq.s32.totalorder %s14, 0
      %p29 = por %p27, %p28
      %p30 = scmp.ne.s32.totalorder %s22, %s24
      %p31 = scmp.eq.s32.totalorder %s19, 1
      %p32 = por %p30, %p31
      %p33 = scmp.ne.s32.totalorder %s24, %s25
      %p34 = scmp.eq.s32.totalorder %s19, 0
      %p35 = por %p33, %p34
      %p36 = scmp.ne.s32.totalorder %s24, %s25
      %p37 = scmp.eq.s32.totalorder %s20, 1
      %p38 = por %p36, %p37
      %p40 = scmp.ne.s32.totalorder %s25, %s39
      %p41 = scmp.eq.s32.totalorder %s20, 0
      %p42 = por %p40, %p41
      %s44 = sadd.s32 %s43, 1
      %p47 = scmp.eq.s32.totalorder %s14, 1
      %p48 = scmp.ne.s32.totalorder %s43, %s45
      %p49 = scmp.eq.s32.totalorder %s14, 0
      %p50 = por %p48, %p49
      %p51 = scmp.ne.s32.totalorder %s43, %s45
      %p52 = scmp.eq.s32.totalorder %s19, 1
      %p53 = por %p51, %p52
      %p54 = scmp.ne.s32.totalorder %s45, %s46
      %p55 = scmp.eq.s32.totalorder %s19, 0
      %p56 = por %p54, %p55
      %p57 = scmp.ne.s32.totalorder %s45, %s46
      %p58 = scmp.eq.s32.totalorder %s20, 1
      %p59 = por %p57, %p58
      %p61 = scmp.ne.s32.totalorder %s46, %s60
      %p62 = scmp.eq.s32.totalorder %s20, 0
      %p63 = por %p61, %p62
      %s64 = ssub.s32 %s14, %s21
      %p65 = scmp.eq.s32.totalorder %s64, 0
      %s67 = sadd.s32 %s66, 1
      %s68 = scalar_select %p65, %s66, %s67
      %p71 = pneg %p65
      %p72 = scmp.eq.s32.totalorder %s14, 1
      %p73 = por %p71, %p72
      %p74 = scmp.ne.s32.totalorder %s66, %s69
      %p75 = scmp.eq.s32.totalorder %s14, 0
      %p76 = por %p74, %p75
      %p77 = scmp.ne.s32.totalorder %s66, %s69
      %p78 = scmp.eq.s32.totalorder %s19, 1
      %p79 = por %p77, %p78
      %p80 = scmp.ne.s32.totalorder %s69, %s70
      %p81 = scmp.eq.s32.totalorder %s19, 0
      %p82 = por %p80, %p81
      %p83 = scmp.ne.s32.totalorder %s69, %s70
      %p84 = scmp.eq.s32.totalorder %s20, 1
      %p85 = por %p83, %p84
      %p87 = scmp.ne.s32.totalorder %s70, %s86
      %p88 = scmp.eq.s32.totalorder %s20, 0
      %p89 = por %p87, %p88
      %s90 = ssub.s32 %s14, %s21
      %p91 = scmp.eq.s32.totalorder %s90, 0
      %s93 = sadd.s32 %s92, 1
      %s94 = scalar_select %p91, %s92, %s93
      %p97 = pneg %p91
      %p98 = scmp.eq.s32.totalorder %s14, 1
      %p99 = por %p97, %p98
      %p100 = scmp.ne.s32.totalorder %s92, %s95
      %p101 = scmp.eq.s32.totalorder %s14, 0
      %p102 = por %p100, %p101
      %p103 = scmp.ne.s32.totalorder %s92, %s95
      %p104 = scmp.eq.s32.totalorder %s19, 1
      %p105 = por %p103, %p104
      %p106 = scmp.ne.s32.totalorder %s95, %s96
      %p107 = scmp.eq.s32.totalorder %s19, 0
      %p108 = por %p106, %p107
      %p109 = scmp.ne.s32.totalorder %s95, %s96
      %p110 = scmp.eq.s32.totalorder %s20, 1
      %p111 = por %p109, %p110
      %p113 = scmp.ne.s32.totalorder %s96, %s112
      %p114 = scmp.eq.s32.totalorder %s20, 0
      %p115 = por %p113, %p114
      %p116 = scmp.le.s32.totalorder 1, %s14
      %p117 = scmp.lt.s32.totalorder %s14, 3
      %p118 = pnand %p116, %p117
      %p119 = pneg %p118
      // Predicated region
      $region9: #{tpu_custom_call.1} parent=5 // pred_check
        _
      $region10: #{tpu_custom_call.1} parent=5 // pred_check_branch
        %121 = sbr.rel (%p118) target = $region12
      $region11: #{tpu_custom_call.1} parent=5 // pred_region
        %s122 = ssub.s32 %s14, 1
        // Predicated region
        $region13: #{tpu_custom_call.1} parent=11 // pred_check
          %p123 = pneg %p35
        $region14: #{tpu_custom_call.1} parent=11 // pred_check_branch
          %125 = sbr.rel (%p123) target = $region16
        $region15: #{tpu_custom_call.1} parent=11 // pred_region
          %s127 = ssub.s32 8192, 8192
          %128 = vsyncadd [#allocation3], %s127
          %s129 = sshll.u32 [#allocation2], 4
          %s130 = int_to_ptr.vmem [resolvable:$true] %s129
          %135 = dma.hbm_to_vmem [thread:$0]  %s0, 8192, %s130, [#allocation3], 256, 256, 16
        $region16: #{tpu_custom_call.1} parent=11 // pred_fallthru
          _
        // Predicated region
        $region17: #{tpu_custom_call.1} parent=11 // pred_check
          %p136 = pneg %p56
        $region18: #{tpu_custom_call.1} parent=11 // pred_check_branch
          %138 = sbr.rel (%p136) target = $region20
        $region19: #{tpu_custom_call.1} parent=11 // pred_region
          %s140 = ssub.s32 256, 256
          %141 = vsyncadd [#allocation6], %s140
          %s142 = sshll.u32 [#allocation5], 4
          %s143 = int_to_ptr.vmem [resolvable:$true] %s142
          %148 = dma.hbm_to_vmem [thread:$0]  %s1, 256, %s143, [#allocation6], 128, 128, 8
        $region20: #{tpu_custom_call.1} parent=11 // pred_fallthru
          _
      $region12: #{tpu_custom_call.1} parent=5 // pred_fallthru
        _
      %p149 = scmp.lt.s32.totalorder %s14, 2
      // Predicated region
      $region21: #{tpu_custom_call.1} parent=5 // pred_check
        %p150 = pneg %p149
      $region22: #{tpu_custom_call.1} parent=5 // pred_check_branch
        %152 = sbr.rel (%p150) target = $region24
      $region23: #{tpu_custom_call.1} parent=5 // pred_region
        // Predicated region
        $region25: #{tpu_custom_call.1} parent=23 // pred_check
          %p153 = pneg %p76
        $region26: #{tpu_custom_call.1} parent=23 // pred_check_branch
          %155 = sbr.rel (%p153) target = $region28
        $region27: #{tpu_custom_call.1} parent=23 // pred_region
          %s156 = sand.u32 %s14, 1
          %s157 = scalar_lea.sflag [#allocation3], %s156
          %s158 = sand.u32 %s66, 1
          %s159 = smul.addr %s158, 32
          %s160 = scalar_lea.vmem [#allocation7], %s159
          %s162 = ssub.s32 512, 512
          %163 = vsyncadd %s157, %s162
          %s164 = smul.addr %s14, 4
          %s165 = smul.addr %s164, 128
          %s166 = scalar_lea.hbm %s2, %s165
          %s167 = sshll.u32 %s160, 4
          %s168 = int_to_ptr.vmem [resolvable:$true] %s167
          %173 = dma.hbm_to_vmem [thread:$0]  %s166, 512, %s168, %s157, 256, 256, 16
        $region28: #{tpu_custom_call.1} parent=23 // pred_fallthru
          _
      $region24: #{tpu_custom_call.1} parent=5 // pred_fallthru
        _
      %p174 = scmp.le.s32.totalorder 1, %s14
      %p175 = scmp.lt.s32.totalorder %s14, 3
      %p176 = pnand %p174, %p175
      %p177 = pneg %p176
      // Predicated region
      $region29: #{tpu_custom_call.1} parent=5 // pred_check
        _
      $region30: #{tpu_custom_call.1} parent=5 // pred_check_branch
        %179 = sbr.rel (%p176) target = $region32
      $region31: #{tpu_custom_call.1} parent=5 // pred_region
        %s180 = ssub.s32 %s14, 1
        // Predicated region
        $region33: #{tpu_custom_call.1} parent=31 // pred_check
          %p181 = pneg %p35
        $region34: #{tpu_custom_call.1} parent=31 // pred_check_branch
          %183 = sbr.rel (%p181) target = $region36
        $region35: #{tpu_custom_call.1} parent=31 // pred_region
          %184 = dma.done [#allocation3], 8192
        $region36: #{tpu_custom_call.1} parent=31 // pred_fallthru
          _
        // Predicated region
        $region37: #{tpu_custom_call.1} parent=31 // pred_check
          %p185 = pneg %p56
        $region38: #{tpu_custom_call.1} parent=31 // pred_check_branch
          %187 = sbr.rel (%p185) target = $region40
        $region39: #{tpu_custom_call.1} parent=31 // pred_region
          %188 = dma.done [#allocation6], 256
        $region40: #{tpu_custom_call.1} parent=31 // pred_fallthru
          _
        %s189 = sand.u32 %s19, 1
        %s190 = scalar_lea.sflag [#allocation3], %s189
        %s191 = sand.u32 %s69, 1
        %s192 = smul.addr %s191, 32
        %s193 = scalar_lea.vmem [#allocation7], %s192
        // Predicated region
        $region41: #{tpu_custom_call.1} parent=31 // pred_check
          %p194 = pneg %p82
        $region42: #{tpu_custom_call.1} parent=31 // pred_check_branch
          %196 = sbr.rel (%p194) target = $region44
        $region43: #{tpu_custom_call.1} parent=31 // pred_region
          %197 = dma.done %s190, 512
        $region44: #{tpu_custom_call.1} parent=31 // pred_fallthru
          _
        %p198 = pneg %p35
        %p199 = pneg %p32
        %p200 = pneg %p56
        %p201 = pneg %p53
        %s202 = sand.u32 %s19, 1
        %s203 = scalar_lea.sflag [#allocation3], %s202
        %s204 = sand.u32 %s69, 1
        %s205 = smul.addr %s204, 32
        %s206 = scalar_lea.vmem [#allocation7], %s205
        %p207 = pneg %p82
        %p208 = pneg %p79
        %p209 = pneg %p108
        %p210 = pneg %p105
        %s211 = sand.u32 %s95, 1
        %s212 = scalar_lea.sflag [#allocation4], %s211
        %s213 = sand.u32 %s95, 1
        %s214 = smul.addr %s213, 32
        %s215 = scalar_lea.vmem [#allocation8], %s214
        %v216 = vld [vmem:[%s193] sm:$0xff]
        %v217 = vld [vmem:[%s193 + $0x8] sm:$0xff]
        %v218 = vld [vmem:[%s193 + $0x10] sm:$0xff]
        %v219 = vld [vmem:[%s193 + $0x18] sm:$0xff]
        %v220 = vld [vmem:[#allocation2] sm:$0xff]
        %v221 = vld [vmem:[#allocation2 + $0x8] sm:$0xff]
        %v222 = vld [vmem:[#allocation2 + $0x10] sm:$0xff]
        %v223 = vld [vmem:[#allocation2 + $0x18] sm:$0xff]
        %v224 = vld [vmem:[#allocation2 + $0x20] sm:$0xff]
        %v225 = vld [vmem:[#allocation2 + $0x28] sm:$0xff]
        %v226 = vld [vmem:[#allocation2 + $0x30] sm:$0xff]
        %v227 = vld [vmem:[#allocation2 + $0x38] sm:$0xff]
        %v228 = vld [vmem:[#allocation2 + $0x40] sm:$0xff]
        %v229 = vld [vmem:[#allocation2 + $0x48] sm:$0xff]
        %v230 = vld [vmem:[#allocation2 + $0x50] sm:$0xff]
        %v231 = vld [vmem:[#allocation2 + $0x58] sm:$0xff]
        %v232 = vld [vmem:[#allocation2 + $0x60] sm:$0xff]
        %v233 = vld [vmem:[#allocation2 + $0x68] sm:$0xff]
        %v234 = vld [vmem:[#allocation2 + $0x70] sm:$0xff]
        %v235 = vld [vmem:[#allocation2 + $0x78] sm:$0xff]
        %v236 = vld [vmem:[#allocation2 + $0x80] sm:$0xff]
        %v237 = vld [vmem:[#allocation2 + $0x88] sm:$0xff]
        %v238 = vld [vmem:[#allocation2 + $0x90] sm:$0xff]
        %v239 = vld [vmem:[#allocation2 + $0x98] sm:$0xff]
        %v240 = vld [vmem:[#allocation2 + $0xa0] sm:$0xff]
        %v241 = vld [vmem:[#allocation2 + $0xa8] sm:$0xff]
        %v242 = vld [vmem:[#allocation2 + $0xb0] sm:$0xff]
        %v243 = vld [vmem:[#allocation2 + $0xb8] sm:$0xff]
        %v244 = vld [vmem:[#allocation2 + $0xc0] sm:$0xff]
        %v245 = vld [vmem:[#allocation2 + $0xc8] sm:$0xff]
        %v246 = vld [vmem:[#allocation2 + $0xd0] sm:$0xff]
        %v247 = vld [vmem:[#allocation2 + $0xd8] sm:$0xff]
        %v248 = vld [vmem:[#allocation2 + $0xe0] sm:$0xff]
        %v249 = vld [vmem:[#allocation2 + $0xe8] sm:$0xff]
        %v250 = vld [vmem:[#allocation2 + $0xf0] sm:$0xff]
        %v251 = vld [vmem:[#allocation2 + $0xf8] sm:$0xff]
        %v252 = vld [vmem:[#allocation2 + $0x100] sm:$0xff]
        %v253 = vld [vmem:[#allocation2 + $0x108] sm:$0xff]
        %v254 = vld [vmem:[#allocation2 + $0x110] sm:$0xff]
        %v255 = vld [vmem:[#allocation2 + $0x118] sm:$0xff]
        %v256 = vld [vmem:[#allocation2 + $0x120] sm:$0xff]
        %v257 = vld [vmem:[#allocation2 + $0x128] sm:$0xff]
        %v258 = vld [vmem:[#allocation2 + $0x130] sm:$0xff]
        %v259 = vld [vmem:[#allocation2 + $0x138] sm:$0xff]
        %v260 = vld [vmem:[#allocation2 + $0x140] sm:$0xff]
        %v261 = vld [vmem:[#allocation2 + $0x148] sm:$0xff]
        %v262 = vld [vmem:[#allocation2 + $0x150] sm:$0xff]
        %v263 = vld [vmem:[#allocation2 + $0x158] sm:$0xff]
        %v264 = vld [vmem:[#allocation2 + $0x160] sm:$0xff]
        %v265 = vld [vmem:[#allocation2 + $0x168] sm:$0xff]
        %v266 = vld [vmem:[#allocation2 + $0x170] sm:$0xff]
        %v267 = vld [vmem:[#allocation2 + $0x178] sm:$0xff]
        %v268 = vld [vmem:[#allocation2 + $0x180] sm:$0xff]
        %v269 = vld [vmem:[#allocation2 + $0x188] sm:$0xff]
        %v270 = vld [vmem:[#allocation2 + $0x190] sm:$0xff]
        %v271 = vld [vmem:[#allocation2 + $0x198] sm:$0xff]
        %v272 = vld [vmem:[#allocation2 + $0x1a0] sm:$0xff]
        %v273 = vld [vmem:[#allocation2 + $0x1a8] sm:$0xff]
        %v274 = vld [vmem:[#allocation2 + $0x1b0] sm:$0xff]
        %v275 = vld [vmem:[#allocation2 + $0x1b8] sm:$0xff]
        %v276 = vld [vmem:[#allocation2 + $0x1c0] sm:$0xff]
        %v277 = vld [vmem:[#allocation2 + $0x1c8] sm:$0xff]
        %v278 = vld [vmem:[#allocation2 + $0x1d0] sm:$0xff]
        %v279 = vld [vmem:[#allocation2 + $0x1d8] sm:$0xff]
        %v280 = vld [vmem:[#allocation2 + $0x1e0] sm:$0xff]
        %v281 = vld [vmem:[#allocation2 + $0x1e8] sm:$0xff]
        %v282 = vld [vmem:[#allocation2 + $0x1f0] sm:$0xff]
        %v283 = vld [vmem:[#allocation2 + $0x1f8] sm:$0xff]
        %v284 = vand.u32 %v251, 4294901760
        %285 = vmatprep.subr.mxu0 %v284
        %v286 = vand.u32 %v250, 4294901760
        %287 = vmatpush1.msra.mxu0 %v286
        %v288 = vand.u32 %v249, 4294901760
        %289 = vmatprep.subr.mxu0 %v288
        %v290 = vand.u32 %v248, 4294901760
        %291 = vmatpush1.msra.mxu0 %v290
        %v292 = vand.u32 %v247, 4294901760
        %293 = vmatprep.subr.mxu0 %v292
        %v294 = vand.u32 %v246, 4294901760
        %295 = vmatpush1.msra.mxu0 %v294
        %v296 = vand.u32 %v245, 4294901760
        %297 = vmatprep.subr.mxu0 %v296
        %v298 = vand.u32 %v244, 4294901760
        %299 = vmatpush1.msra.mxu0 %v298
        %v300 = vand.u32 %v243, 4294901760
        %301 = vmatprep.subr.mxu0 %v300
        %v302 = vand.u32 %v242, 4294901760
        %303 = vmatpush1.msra.mxu0 %v302
        %v304 = vand.u32 %v241, 4294901760
        %305 = vmatprep.subr.mxu0 %v304
        %v306 = vand.u32 %v240, 4294901760
        %307 = vmatpush1.msra.mxu0 %v306
        %v308 = vand.u32 %v239, 4294901760
        %309 = vmatprep.subr.mxu0 %v308
        %v310 = vand.u32 %v238, 4294901760
        %311 = vmatpush1.msra.mxu0 %v310
        %v312 = vand.u32 %v237, 4294901760
        %313 = vmatprep.subr.mxu0 %v312
        %v314 = vand.u32 %v236, 4294901760
        %315 = vmatpush1.msra.mxu0 %v314
        %v316 = vand.u32 %v235, 4294901760
        %317 = vmatprep.subr.mxu0 %v316
        %v318 = vand.u32 %v234, 4294901760
        %319 = vmatpush1.msra.mxu0 %v318
        %v320 = vand.u32 %v233, 4294901760
        %321 = vmatprep.subr.mxu0 %v320
        %v322 = vand.u32 %v232, 4294901760
        %323 = vmatpush1.msra.mxu0 %v322
        %v324 = vand.u32 %v231, 4294901760
        %325 = vmatprep.subr.mxu0 %v324
        %v326 = vand.u32 %v230, 4294901760
        %327 = vmatpush1.msra.mxu0 %v326
        %v328 = vand.u32 %v229, 4294901760
        %329 = vmatprep.subr.mxu0 %v328
        %v330 = vand.u32 %v228, 4294901760
        %331 = vmatpush1.msra.mxu0 %v330
        %v332 = vand.u32 %v227, 4294901760
        %333 = vmatprep.subr.mxu0 %v332
        %v334 = vand.u32 %v226, 4294901760
        %335 = vmatpush1.msra.mxu0 %v334
        %v336 = vand.u32 %v225, 4294901760
        %337 = vmatprep.subr.mxu0 %v336
        %v338 = vand.u32 %v224, 4294901760
        %339 = vmatpush1.msra.mxu0 %v338
        %v340 = vand.u32 %v223, 4294901760
        %341 = vmatprep.subr.mxu0 %v340
        %v342 = vand.u32 %v222, 4294901760
        %343 = vmatpush1.msra.mxu0 %v342
        %v344 = vand.u32 %v221, 4294901760
        %345 = vmatprep.subr.mxu0 %v344
        %v346 = vand.u32 %v220, 4294901760
        %347 = vmatpush1.msra.mxu0 %v346
        %v348 = vand.u32 %v283, 4294901760
        %349 = vmatprep.subr.mxu0 %v348
        %v350 = vand.u32 %v282, 4294901760
        %351 = vmatpush2.msra.mxu0 %v350
        %v352 = vand.u32 %v281, 4294901760
        %353 = vmatprep.subr.mxu0 %v352
        %v354 = vand.u32 %v280, 4294901760
        %355 = vmatpush2.msra.mxu0 %v354
        %v356 = vand.u32 %v279, 4294901760
        %357 = vmatprep.subr.mxu0 %v356
        %v358 = vand.u32 %v278, 4294901760
        %359 = vmatpush2.msra.mxu0 %v358
        %v360 = vand.u32 %v277, 4294901760
        %361 = vmatprep.subr.mxu0 %v360
        %v362 = vand.u32 %v276, 4294901760
        %363 = vmatpush2.msra.mxu0 %v362
        %v364 = vand.u32 %v275, 4294901760
        %365 = vmatprep.subr.mxu0 %v364
        %v366 = vand.u32 %v274, 4294901760
        %367 = vmatpush2.msra.mxu0 %v366
        %v368 = vand.u32 %v273, 4294901760
        %369 = vmatprep.subr.mxu0 %v368
        %v370 = vand.u32 %v272, 4294901760
        %371 = vmatpush2.msra.mxu0 %v370
        %v372 = vand.u32 %v271, 4294901760
        %373 = vmatprep.subr.mxu0 %v372
        %v374 = vand.u32 %v270, 4294901760
        %375 = vmatpush2.msra.mxu0 %v374
        %v376 = vand.u32 %v269, 4294901760
        %377 = vmatprep.subr.mxu0 %v376
        %v378 = vand.u32 %v268, 4294901760
        %379 = vmatpush2.msra.mxu0 %v378
        %v380 = vand.u32 %v267, 4294901760
        %381 = vmatprep.subr.mxu0 %v380
        %v382 = vand.u32 %v266, 4294901760
        %383 = vmatpush2.msra.mxu0 %v382
        %v384 = vand.u32 %v265, 4294901760
        %385 = vmatprep.subr.mxu0 %v384
        %v386 = vand.u32 %v264, 4294901760
        %387 = vmatpush2.msra.mxu0 %v386
        %v388 = vand.u32 %v263, 4294901760
        %389 = vmatprep.subr.mxu0 %v388
        %v390 = vand.u32 %v262, 4294901760
        %391 = vmatpush2.msra.mxu0 %v390
        %v392 = vand.u32 %v261, 4294901760
        %393 = vmatprep.subr.mxu0 %v392
        %v394 = vand.u32 %v260, 4294901760
        %395 = vmatpush2.msra.mxu0 %v394
        %v396 = vand.u32 %v259, 4294901760
        %397 = vmatprep.subr.mxu0 %v396
        %v398 = vand.u32 %v258, 4294901760
        %399 = vmatpush2.msra.mxu0 %v398
        %v400 = vand.u32 %v257, 4294901760
        %401 = vmatprep.subr.mxu0 %v400
        %v402 = vand.u32 %v256, 4294901760
        %403 = vmatpush2.msra.mxu0 %v402
        %v404 = vand.u32 %v255, 4294901760
        %405 = vmatprep.subr.mxu0 %v404
        %v406 = vand.u32 %v254, 4294901760
        %407 = vmatpush2.msra.mxu0 %v406
        %v408 = vand.u32 %v253, 4294901760
        %409 = vmatprep.subr.mxu0 %v408
        %v410 = vand.u32 %v252, 4294901760
        %411 = vmatpush2.msra.mxu0 %v410
        %v412 = vand.u32 %v217, 4294901760
        %v413 = vsub.f32 %v217, %v412
        %v414 = vand.u32 %v413, 4294901760
        %v415 = vsub.f32 %v413, %v414
        %v416 = vand.u32 %v415, 4294901760
        %417 = vmatprep.mubr.f32.mxu0 %v416
        %v418 = vand.u32 %v216, 4294901760
        %v419 = vsub.f32 %v216, %v418
        %v420 = vand.u32 %v419, 4294901760
        %v421 = vsub.f32 %v419, %v420
        %v422 = vand.u32 %v421, 4294901760
        %423 = vmatmul.mubr.f32.gmra.mxu0 %v422
        %v424 = vpop.f32.mrf.mxu0
        %v425 = vadd.f32 0.0, %v424
        %v426 = vpop.f32.mrf.mxu0
        %v427 = vadd.f32 0.0, %v426
        %v428 = vand.u32 %v219, 4294901760
        %v429 = vsub.f32 %v219, %v428
        %v430 = vand.u32 %v429, 4294901760
        %v431 = vsub.f32 %v429, %v430
        %v432 = vand.u32 %v431, 4294901760
        %433 = vmatprep.mubr.f32.mxu0 %v432
        %v434 = vand.u32 %v218, 4294901760
        %v435 = vsub.f32 %v218, %v434
        %v436 = vand.u32 %v435, 4294901760
        %v437 = vsub.f32 %v435, %v436
        %v438 = vand.u32 %v437, 4294901760
        %439 = vmatmul.mubr.f32.gmra.mxu0 %v438
        %v440 = vpop.f32.mrf.mxu0
        %v441 = vadd.f32 0.0, %v440
        %v442 = vpop.f32.mrf.mxu0
        %v443 = vadd.f32 0.0, %v442
        %444 = vdwg.mxu0
        %v445 = vand.u32 %v251, 4294901760
        %v446 = vsub.f32 %v251, %v445
        %v447 = vand.u32 %v446, 4294901760
        %v448 = vsub.f32 %v446, %v447
        %v449 = vand.u32 %v448, 4294901760
        %450 = vmatprep.subr.mxu0 %v449
        %v451 = vand.u32 %v250, 4294901760
        %v452 = vsub.f32 %v250, %v451
        %v453 = vand.u32 %v452, 4294901760
        %v454 = vsub.f32 %v452, %v453
        %v455 = vand.u32 %v454, 4294901760
        %456 = vmatpush1.msra.mxu0 %v455
        %v457 = vand.u32 %v249, 4294901760
        %v458 = vsub.f32 %v249, %v457
        %v459 = vand.u32 %v458, 4294901760
        %v460 = vsub.f32 %v458, %v459
        %v461 = vand.u32 %v460, 4294901760
        %462 = vmatprep.subr.mxu0 %v461
        %v463 = vand.u32 %v248, 4294901760
        %v464 = vsub.f32 %v248, %v463
        %v465 = vand.u32 %v464, 4294901760
        %v466 = vsub.f32 %v464, %v465
        %v467 = vand.u32 %v466, 4294901760
        %468 = vmatpush1.msra.mxu0 %v467
        %v469 = vand.u32 %v247, 4294901760
        %v470 = vsub.f32 %v247, %v469
        %v471 = vand.u32 %v470, 4294901760
        %v472 = vsub.f32 %v470, %v471
        %v473 = vand.u32 %v472, 4294901760
        %474 = vmatprep.subr.mxu0 %v473
        %v475 = vand.u32 %v246, 4294901760
        %v476 = vsub.f32 %v246, %v475
        %v477 = vand.u32 %v476, 4294901760
        %v478 = vsub.f32 %v476, %v477
        %v479 = vand.u32 %v478, 4294901760
        %480 = vmatpush1.msra.mxu0 %v479
        %v481 = vand.u32 %v245, 4294901760
        %v482 = vsub.f32 %v245, %v481
        %v483 = vand.u32 %v482, 4294901760
        %v484 = vsub.f32 %v482, %v483
        %v485 = vand.u32 %v484, 4294901760
        %486 = vmatprep.subr.mxu0 %v485
        %v487 = vand.u32 %v244, 4294901760
        %v488 = vsub.f32 %v244, %v487
        %v489 = vand.u32 %v488, 4294901760
        %v490 = vsub.f32 %v488, %v489
        %v491 = vand.u32 %v490, 4294901760
        %492 = vmatpush1.msra.mxu0 %v491
        %v493 = vand.u32 %v243, 4294901760
        %v494 = vsub.f32 %v243, %v493
        %v495 = vand.u32 %v494, 4294901760
        %v496 = vsub.f32 %v494, %v495
        %v497 = vand.u32 %v496, 4294901760
        %498 = vmatprep.subr.mxu0 %v497
        %v499 = vand.u32 %v242, 4294901760
        %v500 = vsub.f32 %v242, %v499
        %v501 = vand.u32 %v500, 4294901760
        %v502 = vsub.f32 %v500, %v501
        %v503 = vand.u32 %v502, 4294901760
        %504 = vmatpush1.msra.mxu0 %v503
        %v505 = vand.u32 %v241, 4294901760
        %v506 = vsub.f32 %v241, %v505
        %v507 = vand.u32 %v506, 4294901760
        %v508 = vsub.f32 %v506, %v507
        %v509 = vand.u32 %v508, 4294901760
        %510 = vmatprep.subr.mxu0 %v509
        %v511 = vand.u32 %v240, 4294901760
        %v512 = vsub.f32 %v240, %v511
        %v513 = vand.u32 %v512, 4294901760
        %v514 = vsub.f32 %v512, %v513
        %v515 = vand.u32 %v514, 4294901760
        %516 = vmatpush1.msra.mxu0 %v515
        %v517 = vand.u32 %v239, 4294901760
        %v518 = vsub.f32 %v239, %v517
        %v519 = vand.u32 %v518, 4294901760
        %v520 = vsub.f32 %v518, %v519
        %v521 = vand.u32 %v520, 4294901760
        %522 = vmatprep.subr.mxu0 %v521
        %v523 = vand.u32 %v238, 4294901760
        %v524 = vsub.f32 %v238, %v523
        %v525 = vand.u32 %v524, 4294901760
        %v526 = vsub.f32 %v524, %v525
        %v527 = vand.u32 %v526, 4294901760
        %528 = vmatpush1.msra.mxu0 %v527
        %v529 = vand.u32 %v237, 4294901760
        %v530 = vsub.f32 %v237, %v529
        %v531 = vand.u32 %v530, 4294901760
        %v532 = vsub.f32 %v530, %v531
        %v533 = vand.u32 %v532, 4294901760
        %534 = vmatprep.subr.mxu0 %v533
        %v535 = vand.u32 %v236, 4294901760
        %v536 = vsub.f32 %v236, %v535
        %v537 = vand.u32 %v536, 4294901760
        %v538 = vsub.f32 %v536, %v537
        %v539 = vand.u32 %v538, 4294901760
        %540 = vmatpush1.msra.mxu0 %v539
        %v541 = vand.u32 %v235, 4294901760
        %v542 = vsub.f32 %v235, %v541
        %v543 = vand.u32 %v542, 4294901760
        %v544 = vsub.f32 %v542, %v543
        %v545 = vand.u32 %v544, 4294901760
        %546 = vmatprep.subr.mxu0 %v545
        %v547 = vand.u32 %v234, 4294901760
        %v548 = vsub.f32 %v234, %v547
        %v549 = vand.u32 %v548, 4294901760
        %v550 = vsub.f32 %v548, %v549
        %v551 = vand.u32 %v550, 4294901760
        %552 = vmatpush1.msra.mxu0 %v551
        %v553 = vand.u32 %v233, 4294901760
        %v554 = vsub.f32 %v233, %v553
        %v555 = vand.u32 %v554, 4294901760
        %v556 = vsub.f32 %v554, %v555
        %v557 = vand.u32 %v556, 4294901760
        %558 = vmatprep.subr.mxu0 %v557
        %v559 = vand.u32 %v232, 4294901760
        %v560 = vsub.f32 %v232, %v559
        %v561 = vand.u32 %v560, 4294901760
        %v562 = vsub.f32 %v560, %v561
        %v563 = vand.u32 %v562, 4294901760
        %564 = vmatpush1.msra.mxu0 %v563
        %v565 = vand.u32 %v231, 4294901760
        %v566 = vsub.f32 %v231, %v565
        %v567 = vand.u32 %v566, 4294901760
        %v568 = vsub.f32 %v566, %v567
        %v569 = vand.u32 %v568, 4294901760
        %570 = vmatprep.subr.mxu0 %v569
        %v571 = vand.u32 %v230, 4294901760
        %v572 = vsub.f32 %v230, %v571
        %v573 = vand.u32 %v572, 4294901760
        %v574 = vsub.f32 %v572, %v573
        %v575 = vand.u32 %v574, 4294901760
        %576 = vmatpush1.msra.mxu0 %v575
        %v577 = vand.u32 %v229, 4294901760
        %v578 = vsub.f32 %v229, %v577
        %v579 = vand.u32 %v578, 4294901760
        %v580 = vsub.f32 %v578, %v579
        %v581 = vand.u32 %v580, 4294901760
        %582 = vmatprep.subr.mxu0 %v581
        %v583 = vand.u32 %v228, 4294901760
        %v584 = vsub.f32 %v228, %v583
        %v585 = vand.u32 %v584, 4294901760
        %v586 = vsub.f32 %v584, %v585
        %v587 = vand.u32 %v586, 4294901760
        %588 = vmatpush1.msra.mxu0 %v587
        %v589 = vand.u32 %v227, 4294901760
        %v590 = vsub.f32 %v227, %v589
        %v591 = vand.u32 %v590, 4294901760
        %v592 = vsub.f32 %v590, %v591
        %v593 = vand.u32 %v592, 4294901760
        %594 = vmatprep.subr.mxu0 %v593
        %v595 = vand.u32 %v226, 4294901760
        %v596 = vsub.f32 %v226, %v595
        %v597 = vand.u32 %v596, 4294901760
        %v598 = vsub.f32 %v596, %v597
        %v599 = vand.u32 %v598, 4294901760
        %600 = vmatpush1.msra.mxu0 %v599
        %v601 = vand.u32 %v225, 4294901760
        %v602 = vsub.f32 %v225, %v601
        %v603 = vand.u32 %v602, 4294901760
        %v604 = vsub.f32 %v602, %v603
        %v605 = vand.u32 %v604, 4294901760
        %606 = vmatprep.subr.mxu0 %v605
        %v607 = vand.u32 %v224, 4294901760
        %v608 = vsub.f32 %v224, %v607
        %v609 = vand.u32 %v608, 4294901760
        %v610 = vsub.f32 %v608, %v609
        %v611 = vand.u32 %v610, 4294901760
        %612 = vmatpush1.msra.mxu0 %v611
        %v613 = vand.u32 %v223, 4294901760
        %v614 = vsub.f32 %v223, %v613
        %v615 = vand.u32 %v614, 4294901760
        %v616 = vsub.f32 %v614, %v615
        %v617 = vand.u32 %v616, 4294901760
        %618 = vmatprep.subr.mxu0 %v617
        %v619 = vand.u32 %v222, 4294901760
        %v620 = vsub.f32 %v222, %v619
        %v621 = vand.u32 %v620, 4294901760
        %v622 = vsub.f32 %v620, %v621
        %v623 = vand.u32 %v622, 4294901760
        %624 = vmatpush1.msra.mxu0 %v623
        %v625 = vand.u32 %v221, 4294901760
        %v626 = vsub.f32 %v221, %v625
        %v627 = vand.u32 %v626, 4294901760
        %v628 = vsub.f32 %v626, %v627
        %v629 = vand.u32 %v628, 4294901760
        %630 = vmatprep.subr.mxu0 %v629
        %v631 = vand.u32 %v220, 4294901760
        %v632 = vsub.f32 %v220, %v631
        %v633 = vand.u32 %v632, 4294901760
        %v634 = vsub.f32 %v632, %v633
        %v635 = vand.u32 %v634, 4294901760
        %636 = vmatpush1.msra.mxu0 %v635
        %v637 = vand.u32 %v283, 4294901760
        %v638 = vsub.f32 %v283, %v637
        %v639 = vand.u32 %v638, 4294901760
        %v640 = vsub.f32 %v638, %v639
        %v641 = vand.u32 %v640, 4294901760
        %642 = vmatprep.subr.mxu0 %v641
        %v643 = vand.u32 %v282, 4294901760
        %v644 = vsub.f32 %v282, %v643
        %v645 = vand.u32 %v644, 4294901760
        %v646 = vsub.f32 %v644, %v645
        %v647 = vand.u32 %v646, 4294901760
        %648 = vmatpush2.msra.mxu0 %v647
        %v649 = vand.u32 %v281, 4294901760
        %v650 = vsub.f32 %v281, %v649
        %v651 = vand.u32 %v650, 4294901760
        %v652 = vsub.f32 %v650, %v651
        %v653 = vand.u32 %v652, 4294901760
        %654 = vmatprep.subr.mxu0 %v653
        %v655 = vand.u32 %v280, 4294901760
        %v656 = vsub.f32 %v280, %v655
        %v657 = vand.u32 %v656, 4294901760
        %v658 = vsub.f32 %v656, %v657
        %v659 = vand.u32 %v658, 4294901760
        %660 = vmatpush2.msra.mxu0 %v659
        %v661 = vand.u32 %v279, 4294901760
        %v662 = vsub.f32 %v279, %v661
        %v663 = vand.u32 %v662, 4294901760
        %v664 = vsub.f32 %v662, %v663
        %v665 = vand.u32 %v664, 4294901760
        %666 = vmatprep.subr.mxu0 %v665
        %v667 = vand.u32 %v278, 4294901760
        %v668 = vsub.f32 %v278, %v667
        %v669 = vand.u32 %v668, 4294901760
        %v670 = vsub.f32 %v668, %v669
        %v671 = vand.u32 %v670, 4294901760
        %672 = vmatpush2.msra.mxu0 %v671
        %v673 = vand.u32 %v277, 4294901760
        %v674 = vsub.f32 %v277, %v673
        %v675 = vand.u32 %v674, 4294901760
        %v676 = vsub.f32 %v674, %v675
        %v677 = vand.u32 %v676, 4294901760
        %678 = vmatprep.subr.mxu0 %v677
        %v679 = vand.u32 %v276, 4294901760
        %v680 = vsub.f32 %v276, %v679
        %v681 = vand.u32 %v680, 4294901760
        %v682 = vsub.f32 %v680, %v681
        %v683 = vand.u32 %v682, 4294901760
        %684 = vmatpush2.msra.mxu0 %v683
        %v685 = vand.u32 %v275, 4294901760
        %v686 = vsub.f32 %v275, %v685
        %v687 = vand.u32 %v686, 4294901760
        %v688 = vsub.f32 %v686, %v687
        %v689 = vand.u32 %v688, 4294901760
        %690 = vmatprep.subr.mxu0 %v689
        %v691 = vand.u32 %v274, 4294901760
        %v692 = vsub.f32 %v274, %v691
        %v693 = vand.u32 %v692, 4294901760
        %v694 = vsub.f32 %v692, %v693
        %v695 = vand.u32 %v694, 4294901760
        %696 = vmatpush2.msra.mxu0 %v695
        %v697 = vand.u32 %v273, 4294901760
        %v698 = vsub.f32 %v273, %v697
        %v699 = vand.u32 %v698, 4294901760
        %v700 = vsub.f32 %v698, %v699
        %v701 = vand.u32 %v700, 4294901760
        %702 = vmatprep.subr.mxu0 %v701
        %v703 = vand.u32 %v272, 4294901760
        %v704 = vsub.f32 %v272, %v703
        %v705 = vand.u32 %v704, 4294901760
        %v706 = vsub.f32 %v704, %v705
        %v707 = vand.u32 %v706, 4294901760
        %708 = vmatpush2.msra.mxu0 %v707
        %v709 = vand.u32 %v271, 4294901760
        %v710 = vsub.f32 %v271, %v709
        %v711 = vand.u32 %v710, 4294901760
        %v712 = vsub.f32 %v710, %v711
        %v713 = vand.u32 %v712, 4294901760
        %714 = vmatprep.subr.mxu0 %v713
        %v715 = vand.u32 %v270, 4294901760
        %v716 = vsub.f32 %v270, %v715
        %v717 = vand.u32 %v716, 4294901760
        %v718 = vsub.f32 %v716, %v717
        %v719 = vand.u32 %v718, 4294901760
        %720 = vmatpush2.msra.mxu0 %v719
        %v721 = vand.u32 %v269, 4294901760
        %v722 = vsub.f32 %v269, %v721
        %v723 = vand.u32 %v722, 4294901760
        %v724 = vsub.f32 %v722, %v723
        %v725 = vand.u32 %v724, 4294901760
        %726 = vmatprep.subr.mxu0 %v725
        %v727 = vand.u32 %v268, 4294901760
        %v728 = vsub.f32 %v268, %v727
        %v729 = vand.u32 %v728, 4294901760
        %v730 = vsub.f32 %v728, %v729
        %v731 = vand.u32 %v730, 4294901760
        %732 = vmatpush2.msra.mxu0 %v731
        %v733 = vand.u32 %v267, 4294901760
        %v734 = vsub.f32 %v267, %v733
        %v735 = vand.u32 %v734, 4294901760
        %v736 = vsub.f32 %v734, %v735
        %v737 = vand.u32 %v736, 4294901760
        %738 = vmatprep.subr.mxu0 %v737
        %v739 = vand.u32 %v266, 4294901760
        %v740 = vsub.f32 %v266, %v739
        %v741 = vand.u32 %v740, 4294901760
        %v742 = vsub.f32 %v740, %v741
        %v743 = vand.u32 %v742, 4294901760
        %744 = vmatpush2.msra.mxu0 %v743
        %v745 = vand.u32 %v265, 4294901760
        %v746 = vsub.f32 %v265, %v745
        %v747 = vand.u32 %v746, 4294901760
        %v748 = vsub.f32 %v746, %v747
        %v749 = vand.u32 %v748, 4294901760
        %750 = vmatprep.subr.mxu0 %v749
        %v751 = vand.u32 %v264, 4294901760
        %v752 = vsub.f32 %v264, %v751
        %v753 = vand.u32 %v752, 4294901760
        %v754 = vsub.f32 %v752, %v753
        %v755 = vand.u32 %v754, 4294901760
        %756 = vmatpush2.msra.mxu0 %v755
        %v757 = vand.u32 %v263, 4294901760
        %v758 = vsub.f32 %v263, %v757
        %v759 = vand.u32 %v758, 4294901760
        %v760 = vsub.f32 %v758, %v759
        %v761 = vand.u32 %v760, 4294901760
        %762 = vmatprep.subr.mxu0 %v761
        %v763 = vand.u32 %v262, 4294901760
        %v764 = vsub.f32 %v262, %v763
        %v765 = vand.u32 %v764, 4294901760
        %v766 = vsub.f32 %v764, %v765
        %v767 = vand.u32 %v766, 4294901760
        %768 = vmatpush2.msra.mxu0 %v767
        %v769 = vand.u32 %v261, 4294901760
        %v770 = vsub.f32 %v261, %v769
        %v771 = vand.u32 %v770, 4294901760
        %v772 = vsub.f32 %v770, %v771
        %v773 = vand.u32 %v772, 4294901760
        %774 = vmatprep.subr.mxu0 %v773
        %v775 = vand.u32 %v260, 4294901760
        %v776 = vsub.f32 %v260, %v775
        %v777 = vand.u32 %v776, 4294901760
        %v778 = vsub.f32 %v776, %v777
        %v779 = vand.u32 %v778, 4294901760
        %780 = vmatpush2.msra.mxu0 %v779
        %v781 = vand.u32 %v259, 4294901760
        %v782 = vsub.f32 %v259, %v781
        %v783 = vand.u32 %v782, 4294901760
        %v784 = vsub.f32 %v782, %v783
        %v785 = vand.u32 %v784, 4294901760
        %786 = vmatprep.subr.mxu0 %v785
        %v787 = vand.u32 %v258, 4294901760
        %v788 = vsub.f32 %v258, %v787
        %v789 = vand.u32 %v788, 4294901760
        %v790 = vsub.f32 %v788, %v789
        %v791 = vand.u32 %v790, 4294901760
        %792 = vmatpush2.msra.mxu0 %v791
        %v793 = vand.u32 %v257, 4294901760
        %v794 = vsub.f32 %v257, %v793
        %v795 = vand.u32 %v794, 4294901760
        %v796 = vsub.f32 %v794, %v795
        %v797 = vand.u32 %v796, 4294901760
        %798 = vmatprep.subr.mxu0 %v797
        %v799 = vand.u32 %v256, 4294901760
        %v800 = vsub.f32 %v256, %v799
        %v801 = vand.u32 %v800, 4294901760
        %v802 = vsub.f32 %v800, %v801
        %v803 = vand.u32 %v802, 4294901760
        %804 = vmatpush2.msra.mxu0 %v803
        %v805 = vand.u32 %v255, 4294901760
        %v806 = vsub.f32 %v255, %v805
        %v807 = vand.u32 %v806, 4294901760
        %v808 = vsub.f32 %v806, %v807
        %v809 = vand.u32 %v808, 4294901760
        %810 = vmatprep.subr.mxu0 %v809
        %v811 = vand.u32 %v254, 4294901760
        %v812 = vsub.f32 %v254, %v811
        %v813 = vand.u32 %v812, 4294901760
        %v814 = vsub.f32 %v812, %v813
        %v815 = vand.u32 %v814, 4294901760
        %816 = vmatpush2.msra.mxu0 %v815
        %v817 = vand.u32 %v253, 4294901760
        %v818 = vsub.f32 %v253, %v817
        %v819 = vand.u32 %v818, 4294901760
        %v820 = vsub.f32 %v818, %v819
        %v821 = vand.u32 %v820, 4294901760
        %822 = vmatprep.subr.mxu0 %v821
        %v823 = vand.u32 %v252, 4294901760
        %v824 = vsub.f32 %v252, %v823
        %v825 = vand.u32 %v824, 4294901760
        %v826 = vsub.f32 %v824, %v825
        %v827 = vand.u32 %v826, 4294901760
        %828 = vmatpush2.msra.mxu0 %v827
        %v829 = vand.u32 %v217, 4294901760
        %830 = vmatprep.mubr.f32.mxu0 %v829
        %v831 = vand.u32 %v216, 4294901760
        %832 = vmatmul.mubr.f32.gmra.mxu0 %v831
        %v833 = vpop.f32.mrf.mxu0
        %v834 = vadd.f32 %v425, %v833
        %v835 = vpop.f32.mrf.mxu0
        %v836 = vadd.f32 %v427, %v835
        %v837 = vand.u32 %v219, 4294901760
        %838 = vmatprep.mubr.f32.mxu0 %v837
        %v839 = vand.u32 %v218, 4294901760
        %840 = vmatmul.mubr.f32.gmra.mxu0 %v839
        %v841 = vpop.f32.mrf.mxu0
        %v842 = vadd.f32 %v441, %v841
        %v843 = vpop.f32.mrf.mxu0
        %v844 = vadd.f32 %v443, %v843
        %845 = vdwg.mxu0
        %v846 = vand.u32 %v251, 4294901760
        %v847 = vsub.f32 %v251, %v846
        %848 = vmatprep.subr.mxu0 %v847
        %v849 = vand.u32 %v250, 4294901760
        %v850 = vsub.f32 %v250, %v849
        %851 = vmatpush1.msra.mxu0 %v850
        %v852 = vand.u32 %v249, 4294901760
        %v853 = vsub.f32 %v249, %v852
        %854 = vmatprep.subr.mxu0 %v853
        %v855 = vand.u32 %v248, 4294901760
        %v856 = vsub.f32 %v248, %v855
        %857 = vmatpush1.msra.mxu0 %v856
        %v858 = vand.u32 %v247, 4294901760
        %v859 = vsub.f32 %v247, %v858
        %860 = vmatprep.subr.mxu0 %v859
        %v861 = vand.u32 %v246, 4294901760
        %v862 = vsub.f32 %v246, %v861
        %863 = vmatpush1.msra.mxu0 %v862
        %v864 = vand.u32 %v245, 4294901760
        %v865 = vsub.f32 %v245, %v864
        %866 = vmatprep.subr.mxu0 %v865
        %v867 = vand.u32 %v244, 4294901760
        %v868 = vsub.f32 %v244, %v867
        %869 = vmatpush1.msra.mxu0 %v868
        %v870 = vand.u32 %v243, 4294901760
        %v871 = vsub.f32 %v243, %v870
        %872 = vmatprep.subr.mxu0 %v871
        %v873 = vand.u32 %v242, 4294901760
        %v874 = vsub.f32 %v242, %v873
        %875 = vmatpush1.msra.mxu0 %v874
        %v876 = vand.u32 %v241, 4294901760
        %v877 = vsub.f32 %v241, %v876
        %878 = vmatprep.subr.mxu0 %v877
        %v879 = vand.u32 %v240, 4294901760
        %v880 = vsub.f32 %v240, %v879
        %881 = vmatpush1.msra.mxu0 %v880
        %v882 = vand.u32 %v239, 4294901760
        %v883 = vsub.f32 %v239, %v882
        %884 = vmatprep.subr.mxu0 %v883
        %v885 = vand.u32 %v238, 4294901760
        %v886 = vsub.f32 %v238, %v885
        %887 = vmatpush1.msra.mxu0 %v886
        %v888 = vand.u32 %v237, 4294901760
        %v889 = vsub.f32 %v237, %v888
        %890 = vmatprep.subr.mxu0 %v889
        %v891 = vand.u32 %v236, 4294901760
        %v892 = vsub.f32 %v236, %v891
        %893 = vmatpush1.msra.mxu0 %v892
        %v894 = vand.u32 %v235, 4294901760
        %v895 = vsub.f32 %v235, %v894
        %896 = vmatprep.subr.mxu0 %v895
        %v897 = vand.u32 %v234, 4294901760
        %v898 = vsub.f32 %v234, %v897
        %899 = vmatpush1.msra.mxu0 %v898
        %v900 = vand.u32 %v233, 4294901760
        %v901 = vsub.f32 %v233, %v900
        %902 = vmatprep.subr.mxu0 %v901
        %v903 = vand.u32 %v232, 4294901760
        %v904 = vsub.f32 %v232, %v903
        %905 = vmatpush1.msra.mxu0 %v904
        %v906 = vand.u32 %v231, 4294901760
        %v907 = vsub.f32 %v231, %v906
        %908 = vmatprep.subr.mxu0 %v907
        %v909 = vand.u32 %v230, 4294901760
        %v910 = vsub.f32 %v230, %v909
        %911 = vmatpush1.msra.mxu0 %v910
        %v912 = vand.u32 %v229, 4294901760
        %v913 = vsub.f32 %v229, %v912
        %914 = vmatprep.subr.mxu0 %v913
        %v915 = vand.u32 %v228, 4294901760
        %v916 = vsub.f32 %v228, %v915
        %917 = vmatpush1.msra.mxu0 %v916
        %v918 = vand.u32 %v227, 4294901760
        %v919 = vsub.f32 %v227, %v918
        %920 = vmatprep.subr.mxu0 %v919
        %v921 = vand.u32 %v226, 4294901760
        %v922 = vsub.f32 %v226, %v921
        %923 = vmatpush1.msra.mxu0 %v922
        %v924 = vand.u32 %v225, 4294901760
        %v925 = vsub.f32 %v225, %v924
        %926 = vmatprep.subr.mxu0 %v925
        %v927 = vand.u32 %v224, 4294901760
        %v928 = vsub.f32 %v224, %v927
        %929 = vmatpush1.msra.mxu0 %v928
        %v930 = vand.u32 %v223, 4294901760
        %v931 = vsub.f32 %v223, %v930
        %932 = vmatprep.subr.mxu0 %v931
        %v933 = vand.u32 %v222, 4294901760
        %v934 = vsub.f32 %v222, %v933
        %935 = vmatpush1.msra.mxu0 %v934
        %v936 = vand.u32 %v221, 4294901760
        %v937 = vsub.f32 %v221, %v936
        %938 = vmatprep.subr.mxu0 %v937
        %v939 = vand.u32 %v220, 4294901760
        %v940 = vsub.f32 %v220, %v939
        %941 = vmatpush1.msra.mxu0 %v940
        %v942 = vand.u32 %v283, 4294901760
        %v943 = vsub.f32 %v283, %v942
        %944 = vmatprep.subr.mxu0 %v943
        %v945 = vand.u32 %v282, 4294901760
        %v946 = vsub.f32 %v282, %v945
        %947 = vmatpush2.msra.mxu0 %v946
        %v948 = vand.u32 %v281, 4294901760
        %v949 = vsub.f32 %v281, %v948
        %950 = vmatprep.subr.mxu0 %v949
        %v951 = vand.u32 %v280, 4294901760
        %v952 = vsub.f32 %v280, %v951
        %953 = vmatpush2.msra.mxu0 %v952
        %v954 = vand.u32 %v279, 4294901760
        %v955 = vsub.f32 %v279, %v954
        %956 = vmatprep.subr.mxu0 %v955
        %v957 = vand.u32 %v278, 4294901760
        %v958 = vsub.f32 %v278, %v957
        %959 = vmatpush2.msra.mxu0 %v958
        %v960 = vand.u32 %v277, 4294901760
        %v961 = vsub.f32 %v277, %v960
        %962 = vmatprep.subr.mxu0 %v961
        %v963 = vand.u32 %v276, 4294901760
        %v964 = vsub.f32 %v276, %v963
        %965 = vmatpush2.msra.mxu0 %v964
        %v966 = vand.u32 %v275, 4294901760
        %v967 = vsub.f32 %v275, %v966
        %968 = vmatprep.subr.mxu0 %v967
        %v969 = vand.u32 %v274, 4294901760
        %v970 = vsub.f32 %v274, %v969
        %971 = vmatpush2.msra.mxu0 %v970
        %v972 = vand.u32 %v273, 4294901760
        %v973 = vsub.f32 %v273, %v972
        %974 = vmatprep.subr.mxu0 %v973
        %v975 = vand.u32 %v272, 4294901760
        %v976 = vsub.f32 %v272, %v975
        %977 = vmatpush2.msra.mxu0 %v976
        %v978 = vand.u32 %v271, 4294901760
        %v979 = vsub.f32 %v271, %v978
        %980 = vmatprep.subr.mxu0 %v979
        %v981 = vand.u32 %v270, 4294901760
        %v982 = vsub.f32 %v270, %v981
        %983 = vmatpush2.msra.mxu0 %v982
        %v984 = vand.u32 %v269, 4294901760
        %v985 = vsub.f32 %v269, %v984
        %986 = vmatprep.subr.mxu0 %v985
        %v987 = vand.u32 %v268, 4294901760
        %v988 = vsub.f32 %v268, %v987
        %989 = vmatpush2.msra.mxu0 %v988
        %v990 = vand.u32 %v267, 4294901760
        %v991 = vsub.f32 %v267, %v990
        %992 = vmatprep.subr.mxu0 %v991
        %v993 = vand.u32 %v266, 4294901760
        %v994 = vsub.f32 %v266, %v993
        %995 = vmatpush2.msra.mxu0 %v994
        %v996 = vand.u32 %v265, 4294901760
        %v997 = vsub.f32 %v265, %v996
        %998 = vmatprep.subr.mxu0 %v997
        %v999 = vand.u32 %v264, 4294901760
        %v1000 = vsub.f32 %v264, %v999
        %1001 = vmatpush2.msra.mxu0 %v1000
        %v1002 = vand.u32 %v263, 4294901760
        %v1003 = vsub.f32 %v263, %v1002
        %1004 = vmatprep.subr.mxu0 %v1003
        %v1005 = vand.u32 %v262, 4294901760
        %v1006 = vsub.f32 %v262, %v1005
        %1007 = vmatpush2.msra.mxu0 %v1006
        %v1008 = vand.u32 %v261, 4294901760
        %v1009 = vsub.f32 %v261, %v1008
        %1010 = vmatprep.subr.mxu0 %v1009
        %v1011 = vand.u32 %v260, 4294901760
        %v1012 = vsub.f32 %v260, %v1011
        %1013 = vmatpush2.msra.mxu0 %v1012
        %v1014 = vand.u32 %v259, 4294901760
        %v1015 = vsub.f32 %v259, %v1014
        %1016 = vmatprep.subr.mxu0 %v1015
        %v1017 = vand.u32 %v258, 4294901760
        %v1018 = vsub.f32 %v258, %v1017
        %1019 = vmatpush2.msra.mxu0 %v1018
        %v1020 = vand.u32 %v257, 4294901760
        %v1021 = vsub.f32 %v257, %v1020
        %1022 = vmatprep.subr.mxu0 %v1021
        %v1023 = vand.u32 %v256, 4294901760
        %v1024 = vsub.f32 %v256, %v1023
        %1025 = vmatpush2.msra.mxu0 %v1024
        %v1026 = vand.u32 %v255, 4294901760
        %v1027 = vsub.f32 %v255, %v1026
        %1028 = vmatprep.subr.mxu0 %v1027
        %v1029 = vand.u32 %v254, 4294901760
        %v1030 = vsub.f32 %v254, %v1029
        %1031 = vmatpush2.msra.mxu0 %v1030
        %v1032 = vand.u32 %v253, 4294901760
        %v1033 = vsub.f32 %v253, %v1032
        %1034 = vmatprep.subr.mxu0 %v1033
        %v1035 = vand.u32 %v252, 4294901760
        %v1036 = vsub.f32 %v252, %v1035
        %1037 = vmatpush2.msra.mxu0 %v1036
        %v1038 = vand.u32 %v217, 4294901760
        %v1039 = vsub.f32 %v217, %v1038
        %1040 = vmatprep.mubr.f32.mxu0 %v1039
        %v1041 = vand.u32 %v216, 4294901760
        %v1042 = vsub.f32 %v216, %v1041
        %1043 = vmatmul.mubr.f32.gmra.mxu0 %v1042
        %v1044 = vpop.f32.mrf.mxu0
        %v1045 = vadd.f32 %v834, %v1044
        %v1046 = vpop.f32.mrf.mxu0
        %v1047 = vadd.f32 %v836, %v1046
        %v1048 = vand.u32 %v219, 4294901760
        %v1049 = vsub.f32 %v219, %v1048
        %1050 = vmatprep.mubr.f32.mxu0 %v1049
        %v1051 = vand.u32 %v218, 4294901760
        %v1052 = vsub.f32 %v218, %v1051
        %1053 = vmatmul.mubr.f32.gmra.mxu0 %v1052
        %v1054 = vpop.f32.mrf.mxu0
        %v1055 = vadd.f32 %v842, %v1054
        %v1056 = vpop.f32.mrf.mxu0
        %v1057 = vadd.f32 %v844, %v1056
        %1058 = vdwg.mxu0
        %v1059 = vand.u32 %v251, 4294901760
        %1060 = vmatprep.subr.mxu0 %v1059
        %v1061 = vand.u32 %v250, 4294901760
        %1062 = vmatpush1.msra.mxu0 %v1061
        %v1063 = vand.u32 %v249, 4294901760
        %1064 = vmatprep.subr.mxu0 %v1063
        %v1065 = vand.u32 %v248, 4294901760
        %1066 = vmatpush1.msra.mxu0 %v1065
        %v1067 = vand.u32 %v247, 4294901760
        %1068 = vmatprep.subr.mxu0 %v1067
        %v1069 = vand.u32 %v246, 4294901760
        %1070 = vmatpush1.msra.mxu0 %v1069
        %v1071 = vand.u32 %v245, 4294901760
        %1072 = vmatprep.subr.mxu0 %v1071
        %v1073 = vand.u32 %v244, 4294901760
        %1074 = vmatpush1.msra.mxu0 %v1073
        %v1075 = vand.u32 %v243, 4294901760
        %1076 = vmatprep.subr.mxu0 %v1075
        %v1077 = vand.u32 %v242, 4294901760
        %1078 = vmatpush1.msra.mxu0 %v1077
        %v1079 = vand.u32 %v241, 4294901760
        %1080 = vmatprep.subr.mxu0 %v1079
        %v1081 = vand.u32 %v240, 4294901760
        %1082 = vmatpush1.msra.mxu0 %v1081
        %v1083 = vand.u32 %v239, 4294901760
        %1084 = vmatprep.subr.mxu0 %v1083
        %v1085 = vand.u32 %v238, 4294901760
        %1086 = vmatpush1.msra.mxu0 %v1085
        %v1087 = vand.u32 %v237, 4294901760
        %1088 = vmatprep.subr.mxu0 %v1087
        %v1089 = vand.u32 %v236, 4294901760
        %1090 = vmatpush1.msra.mxu0 %v1089
        %v1091 = vand.u32 %v235, 4294901760
        %1092 = vmatprep.subr.mxu0 %v1091
        %v1093 = vand.u32 %v234, 4294901760
        %1094 = vmatpush1.msra.mxu0 %v1093
        %v1095 = vand.u32 %v233, 4294901760
        %1096 = vmatprep.subr.mxu0 %v1095
        %v1097 = vand.u32 %v232, 4294901760
        %1098 = vmatpush1.msra.mxu0 %v1097
        %v1099 = vand.u32 %v231, 4294901760
        %1100 = vmatprep.subr.mxu0 %v1099
        %v1101 = vand.u32 %v230, 4294901760
        %1102 = vmatpush1.msra.mxu0 %v1101
        %v1103 = vand.u32 %v229, 4294901760
        %1104 = vmatprep.subr.mxu0 %v1103
        %v1105 = vand.u32 %v228, 4294901760
        %1106 = vmatpush1.msra.mxu0 %v1105
        %v1107 = vand.u32 %v227, 4294901760
        %1108 = vmatprep.subr.mxu0 %v1107
        %v1109 = vand.u32 %v226, 4294901760
        %1110 = vmatpush1.msra.mxu0 %v1109
        %v1111 = vand.u32 %v225, 4294901760
        %1112 = vmatprep.subr.mxu0 %v1111
        %v1113 = vand.u32 %v224, 4294901760
        %1114 = vmatpush1.msra.mxu0 %v1113
        %v1115 = vand.u32 %v223, 4294901760
        %1116 = vmatprep.subr.mxu0 %v1115
        %v1117 = vand.u32 %v222, 4294901760
        %1118 = vmatpush1.msra.mxu0 %v1117
        %v1119 = vand.u32 %v221, 4294901760
        %1120 = vmatprep.subr.mxu0 %v1119
        %v1121 = vand.u32 %v220, 4294901760
        %1122 = vmatpush1.msra.mxu0 %v1121
        %v1123 = vand.u32 %v283, 4294901760
        %1124 = vmatprep.subr.mxu0 %v1123
        %v1125 = vand.u32 %v282, 4294901760
        %1126 = vmatpush2.msra.mxu0 %v1125
        %v1127 = vand.u32 %v281, 4294901760
        %1128 = vmatprep.subr.mxu0 %v1127
        %v1129 = vand.u32 %v280, 4294901760
        %1130 = vmatpush2.msra.mxu0 %v1129
        %v1131 = vand.u32 %v279, 4294901760
        %1132 = vmatprep.subr.mxu0 %v1131
        %v1133 = vand.u32 %v278, 4294901760
        %1134 = vmatpush2.msra.mxu0 %v1133
        %v1135 = vand.u32 %v277, 4294901760
        %1136 = vmatprep.subr.mxu0 %v1135
        %v1137 = vand.u32 %v276, 4294901760
        %1138 = vmatpush2.msra.mxu0 %v1137
        %v1139 = vand.u32 %v275, 4294901760
        %1140 = vmatprep.subr.mxu0 %v1139
        %v1141 = vand.u32 %v274, 4294901760
        %1142 = vmatpush2.msra.mxu0 %v1141
        %v1143 = vand.u32 %v273, 4294901760
        %1144 = vmatprep.subr.mxu0 %v1143
        %v1145 = vand.u32 %v272, 4294901760
        %1146 = vmatpush2.msra.mxu0 %v1145
        %v1147 = vand.u32 %v271, 4294901760
        %1148 = vmatprep.subr.mxu0 %v1147
        %v1149 = vand.u32 %v270, 4294901760
        %1150 = vmatpush2.msra.mxu0 %v1149
        %v1151 = vand.u32 %v269, 4294901760
        %1152 = vmatprep.subr.mxu0 %v1151
        %v1153 = vand.u32 %v268, 4294901760
        %1154 = vmatpush2.msra.mxu0 %v1153
        %v1155 = vand.u32 %v267, 4294901760
        %1156 = vmatprep.subr.mxu0 %v1155
        %v1157 = vand.u32 %v266, 4294901760
        %1158 = vmatpush2.msra.mxu0 %v1157
        %v1159 = vand.u32 %v265, 4294901760
        %1160 = vmatprep.subr.mxu0 %v1159
        %v1161 = vand.u32 %v264, 4294901760
        %1162 = vmatpush2.msra.mxu0 %v1161
        %v1163 = vand.u32 %v263, 4294901760
        %1164 = vmatprep.subr.mxu0 %v1163
        %v1165 = vand.u32 %v262, 4294901760
        %1166 = vmatpush2.msra.mxu0 %v1165
        %v1167 = vand.u32 %v261, 4294901760
        %1168 = vmatprep.subr.mxu0 %v1167
        %v1169 = vand.u32 %v260, 4294901760
        %1170 = vmatpush2.msra.mxu0 %v1169
        %v1171 = vand.u32 %v259, 4294901760
        %1172 = vmatprep.subr.mxu0 %v1171
        %v1173 = vand.u32 %v258, 4294901760
        %1174 = vmatpush2.msra.mxu0 %v1173
        %v1175 = vand.u32 %v257, 4294901760
        %1176 = vmatprep.subr.mxu0 %v1175
        %v1177 = vand.u32 %v256, 4294901760
        %1178 = vmatpush2.msra.mxu0 %v1177
        %v1179 = vand.u32 %v255, 4294901760
        %1180 = vmatprep.subr.mxu0 %v1179
        %v1181 = vand.u32 %v254, 4294901760
        %1182 = vmatpush2.msra.mxu0 %v1181
        %v1183 = vand.u32 %v253, 4294901760
        %1184 = vmatprep.subr.mxu0 %v1183
        %v1185 = vand.u32 %v252, 4294901760
        %1186 = vmatpush2.msra.mxu0 %v1185
        %v1187 = vand.u32 %v217, 4294901760
        %v1188 = vsub.f32 %v217, %v1187
        %v1189 = vand.u32 %v1188, 4294901760
        %1190 = vmatprep.mubr.f32.mxu0 %v1189
        %v1191 = vand.u32 %v216, 4294901760
        %v1192 = vsub.f32 %v216, %v1191
        %v1193 = vand.u32 %v1192, 4294901760
        %1194 = vmatmul.mubr.f32.gmra.mxu0 %v1193
        %v1195 = vpop.f32.mrf.mxu0
        %v1196 = vadd.f32 %v1045, %v1195
        %v1197 = vpop.f32.mrf.mxu0
        %v1198 = vadd.f32 %v1047, %v1197
        %v1199 = vand.u32 %v219, 4294901760
        %v1200 = vsub.f32 %v219, %v1199
        %v1201 = vand.u32 %v1200, 4294901760
        %1202 = vmatprep.mubr.f32.mxu0 %v1201
        %v1203 = vand.u32 %v218, 4294901760
        %v1204 = vsub.f32 %v218, %v1203
        %v1205 = vand.u32 %v1204, 4294901760
        %1206 = vmatmul.mubr.f32.gmra.mxu0 %v1205
        %v1207 = vpop.f32.mrf.mxu0
        %v1208 = vadd.f32 %v1055, %v1207
        %v1209 = vpop.f32.mrf.mxu0
        %v1210 = vadd.f32 %v1057, %v1209
        %1211 = vdwg.mxu0
        %v1212 = vand.u32 %v251, 4294901760
        %v1213 = vsub.f32 %v251, %v1212
        %v1214 = vand.u32 %v1213, 4294901760
        %1215 = vmatprep.subr.mxu0 %v1214
        %v1216 = vand.u32 %v250, 4294901760
        %v1217 = vsub.f32 %v250, %v1216
        %v1218 = vand.u32 %v1217, 4294901760
        %1219 = vmatpush1.msra.mxu0 %v1218
        %v1220 = vand.u32 %v249, 4294901760
        %v1221 = vsub.f32 %v249, %v1220
        %v1222 = vand.u32 %v1221, 4294901760
        %1223 = vmatprep.subr.mxu0 %v1222
        %v1224 = vand.u32 %v248, 4294901760
        %v1225 = vsub.f32 %v248, %v1224
        %v1226 = vand.u32 %v1225, 4294901760
        %1227 = vmatpush1.msra.mxu0 %v1226
        %v1228 = vand.u32 %v247, 4294901760
        %v1229 = vsub.f32 %v247, %v1228
        %v1230 = vand.u32 %v1229, 4294901760
        %1231 = vmatprep.subr.mxu0 %v1230
        %v1232 = vand.u32 %v246, 4294901760
        %v1233 = vsub.f32 %v246, %v1232
        %v1234 = vand.u32 %v1233, 4294901760
        %1235 = vmatpush1.msra.mxu0 %v1234
        %v1236 = vand.u32 %v245, 4294901760
        %v1237 = vsub.f32 %v245, %v1236
        %v1238 = vand.u32 %v1237, 4294901760
        %1239 = vmatprep.subr.mxu0 %v1238
        %v1240 = vand.u32 %v244, 4294901760
        %v1241 = vsub.f32 %v244, %v1240
        %v1242 = vand.u32 %v1241, 4294901760
        %1243 = vmatpush1.msra.mxu0 %v1242
        %v1244 = vand.u32 %v243, 4294901760
        %v1245 = vsub.f32 %v243, %v1244
        %v1246 = vand.u32 %v1245, 4294901760
        %1247 = vmatprep.subr.mxu0 %v1246
        %v1248 = vand.u32 %v242, 4294901760
        %v1249 = vsub.f32 %v242, %v1248
        %v1250 = vand.u32 %v1249, 4294901760
        %1251 = vmatpush1.msra.mxu0 %v1250
        %v1252 = vand.u32 %v241, 4294901760
        %v1253 = vsub.f32 %v241, %v1252
        %v1254 = vand.u32 %v1253, 4294901760
        %1255 = vmatprep.subr.mxu0 %v1254
        %v1256 = vand.u32 %v240, 4294901760
        %v1257 = vsub.f32 %v240, %v1256
        %v1258 = vand.u32 %v1257, 4294901760
        %1259 = vmatpush1.msra.mxu0 %v1258
        %v1260 = vand.u32 %v239, 4294901760
        %v1261 = vsub.f32 %v239, %v1260
        %v1262 = vand.u32 %v1261, 4294901760
        %1263 = vmatprep.subr.mxu0 %v1262
        %v1264 = vand.u32 %v238, 4294901760
        %v1265 = vsub.f32 %v238, %v1264
        %v1266 = vand.u32 %v1265, 4294901760
        %1267 = vmatpush1.msra.mxu0 %v1266
        %v1268 = vand.u32 %v237, 4294901760
        %v1269 = vsub.f32 %v237, %v1268
        %v1270 = vand.u32 %v1269, 4294901760
        %1271 = vmatprep.subr.mxu0 %v1270
        %v1272 = vand.u32 %v236, 4294901760
        %v1273 = vsub.f32 %v236, %v1272
        %v1274 = vand.u32 %v1273, 4294901760
        %1275 = vmatpush1.msra.mxu0 %v1274
        %v1276 = vand.u32 %v235, 4294901760
        %v1277 = vsub.f32 %v235, %v1276
        %v1278 = vand.u32 %v1277, 4294901760
        %1279 = vmatprep.subr.mxu0 %v1278
        %v1280 = vand.u32 %v234, 4294901760
        %v1281 = vsub.f32 %v234, %v1280
        %v1282 = vand.u32 %v1281, 4294901760
        %1283 = vmatpush1.msra.mxu0 %v1282
        %v1284 = vand.u32 %v233, 4294901760
        %v1285 = vsub.f32 %v233, %v1284
        %v1286 = vand.u32 %v1285, 4294901760
        %1287 = vmatprep.subr.mxu0 %v1286
        %v1288 = vand.u32 %v232, 4294901760
        %v1289 = vsub.f32 %v232, %v1288
        %v1290 = vand.u32 %v1289, 4294901760
        %1291 = vmatpush1.msra.mxu0 %v1290
        %v1292 = vand.u32 %v231, 4294901760
        %v1293 = vsub.f32 %v231, %v1292
        %v1294 = vand.u32 %v1293, 4294901760
        %1295 = vmatprep.subr.mxu0 %v1294
        %v1296 = vand.u32 %v230, 4294901760
        %v1297 = vsub.f32 %v230, %v1296
        %v1298 = vand.u32 %v1297, 4294901760
        %1299 = vmatpush1.msra.mxu0 %v1298
        %v1300 = vand.u32 %v229, 4294901760
        %v1301 = vsub.f32 %v229, %v1300
        %v1302 = vand.u32 %v1301, 4294901760
        %1303 = vmatprep.subr.mxu0 %v1302
        %v1304 = vand.u32 %v228, 4294901760
        %v1305 = vsub.f32 %v228, %v1304
        %v1306 = vand.u32 %v1305, 4294901760
        %1307 = vmatpush1.msra.mxu0 %v1306
        %v1308 = vand.u32 %v227, 4294901760
        %v1309 = vsub.f32 %v227, %v1308
        %v1310 = vand.u32 %v1309, 4294901760
        %1311 = vmatprep.subr.mxu0 %v1310
        %v1312 = vand.u32 %v226, 4294901760
        %v1313 = vsub.f32 %v226, %v1312
        %v1314 = vand.u32 %v1313, 4294901760
        %1315 = vmatpush1.msra.mxu0 %v1314
        %v1316 = vand.u32 %v225, 4294901760
        %v1317 = vsub.f32 %v225, %v1316
        %v1318 = vand.u32 %v1317, 4294901760
        %1319 = vmatprep.subr.mxu0 %v1318
        %v1320 = vand.u32 %v224, 4294901760
        %v1321 = vsub.f32 %v224, %v1320
        %v1322 = vand.u32 %v1321, 4294901760
        %1323 = vmatpush1.msra.mxu0 %v1322
        %v1324 = vand.u32 %v223, 4294901760
        %v1325 = vsub.f32 %v223, %v1324
        %v1326 = vand.u32 %v1325, 4294901760
        %1327 = vmatprep.subr.mxu0 %v1326
        %v1328 = vand.u32 %v222, 4294901760
        %v1329 = vsub.f32 %v222, %v1328
        %v1330 = vand.u32 %v1329, 4294901760
        %1331 = vmatpush1.msra.mxu0 %v1330
        %v1332 = vand.u32 %v221, 4294901760
        %v1333 = vsub.f32 %v221, %v1332
        %v1334 = vand.u32 %v1333, 4294901760
        %1335 = vmatprep.subr.mxu0 %v1334
        %v1336 = vand.u32 %v220, 4294901760
        %v1337 = vsub.f32 %v220, %v1336
        %v1338 = vand.u32 %v1337, 4294901760
        %1339 = vmatpush1.msra.mxu0 %v1338
        %v1340 = vand.u32 %v283, 4294901760
        %v1341 = vsub.f32 %v283, %v1340
        %v1342 = vand.u32 %v1341, 4294901760
        %1343 = vmatprep.subr.mxu0 %v1342
        %v1344 = vand.u32 %v282, 4294901760
        %v1345 = vsub.f32 %v282, %v1344
        %v1346 = vand.u32 %v1345, 4294901760
        %1347 = vmatpush2.msra.mxu0 %v1346
        %v1348 = vand.u32 %v281, 4294901760
        %v1349 = vsub.f32 %v281, %v1348
        %v1350 = vand.u32 %v1349, 4294901760
        %1351 = vmatprep.subr.mxu0 %v1350
        %v1352 = vand.u32 %v280, 4294901760
        %v1353 = vsub.f32 %v280, %v1352
        %v1354 = vand.u32 %v1353, 4294901760
        %1355 = vmatpush2.msra.mxu0 %v1354
        %v1356 = vand.u32 %v279, 4294901760
        %v1357 = vsub.f32 %v279, %v1356
        %v1358 = vand.u32 %v1357, 4294901760
        %1359 = vmatprep.subr.mxu0 %v1358
        %v1360 = vand.u32 %v278, 4294901760
        %v1361 = vsub.f32 %v278, %v1360
        %v1362 = vand.u32 %v1361, 4294901760
        %1363 = vmatpush2.msra.mxu0 %v1362
        %v1364 = vand.u32 %v277, 4294901760
        %v1365 = vsub.f32 %v277, %v1364
        %v1366 = vand.u32 %v1365, 4294901760
        %1367 = vmatprep.subr.mxu0 %v1366
        %v1368 = vand.u32 %v276, 4294901760
        %v1369 = vsub.f32 %v276, %v1368
        %v1370 = vand.u32 %v1369, 4294901760
        %1371 = vmatpush2.msra.mxu0 %v1370
        %v1372 = vand.u32 %v275, 4294901760
        %v1373 = vsub.f32 %v275, %v1372
        %v1374 = vand.u32 %v1373, 4294901760
        %1375 = vmatprep.subr.mxu0 %v1374
        %v1376 = vand.u32 %v274, 4294901760
        %v1377 = vsub.f32 %v274, %v1376
        %v1378 = vand.u32 %v1377, 4294901760
        %1379 = vmatpush2.msra.mxu0 %v1378
        %v1380 = vand.u32 %v273, 4294901760
        %v1381 = vsub.f32 %v273, %v1380
        %v1382 = vand.u32 %v1381, 4294901760
        %1383 = vmatprep.subr.mxu0 %v1382
        %v1384 = vand.u32 %v272, 4294901760
        %v1385 = vsub.f32 %v272, %v1384
        %v1386 = vand.u32 %v1385, 4294901760
        %1387 = vmatpush2.msra.mxu0 %v1386
        %v1388 = vand.u32 %v271, 4294901760
        %v1389 = vsub.f32 %v271, %v1388
        %v1390 = vand.u32 %v1389, 4294901760
        %1391 = vmatprep.subr.mxu0 %v1390
        %v1392 = vand.u32 %v270, 4294901760
        %v1393 = vsub.f32 %v270, %v1392
        %v1394 = vand.u32 %v1393, 4294901760
        %1395 = vmatpush2.msra.mxu0 %v1394
        %v1396 = vand.u32 %v269, 4294901760
        %v1397 = vsub.f32 %v269, %v1396
        %v1398 = vand.u32 %v1397, 4294901760
        %1399 = vmatprep.subr.mxu0 %v1398
        %v1400 = vand.u32 %v268, 4294901760
        %v1401 = vsub.f32 %v268, %v1400
        %v1402 = vand.u32 %v1401, 4294901760
        %1403 = vmatpush2.msra.mxu0 %v1402
        %v1404 = vand.u32 %v267, 4294901760
        %v1405 = vsub.f32 %v267, %v1404
        %v1406 = vand.u32 %v1405, 4294901760
        %1407 = vmatprep.subr.mxu0 %v1406
        %v1408 = vand.u32 %v266, 4294901760
        %v1409 = vsub.f32 %v266, %v1408
        %v1410 = vand.u32 %v1409, 4294901760
        %1411 = vmatpush2.msra.mxu0 %v1410
        %v1412 = vand.u32 %v265, 4294901760
        %v1413 = vsub.f32 %v265, %v1412
        %v1414 = vand.u32 %v1413, 4294901760
        %1415 = vmatprep.subr.mxu0 %v1414
        %v1416 = vand.u32 %v264, 4294901760
        %v1417 = vsub.f32 %v264, %v1416
        %v1418 = vand.u32 %v1417, 4294901760
        %1419 = vmatpush2.msra.mxu0 %v1418
        %v1420 = vand.u32 %v263, 4294901760
        %v1421 = vsub.f32 %v263, %v1420
        %v1422 = vand.u32 %v1421, 4294901760
        %1423 = vmatprep.subr.mxu0 %v1422
        %v1424 = vand.u32 %v262, 4294901760
        %v1425 = vsub.f32 %v262, %v1424
        %v1426 = vand.u32 %v1425, 4294901760
        %1427 = vmatpush2.msra.mxu0 %v1426
        %v1428 = vand.u32 %v261, 4294901760
        %v1429 = vsub.f32 %v261, %v1428
        %v1430 = vand.u32 %v1429, 4294901760
        %1431 = vmatprep.subr.mxu0 %v1430
        %v1432 = vand.u32 %v260, 4294901760
        %v1433 = vsub.f32 %v260, %v1432
        %v1434 = vand.u32 %v1433, 4294901760
        %1435 = vmatpush2.msra.mxu0 %v1434
        %v1436 = vand.u32 %v259, 4294901760
        %v1437 = vsub.f32 %v259, %v1436
        %v1438 = vand.u32 %v1437, 4294901760
        %1439 = vmatprep.subr.mxu0 %v1438
        %v1440 = vand.u32 %v258, 4294901760
        %v1441 = vsub.f32 %v258, %v1440
        %v1442 = vand.u32 %v1441, 4294901760
        %1443 = vmatpush2.msra.mxu0 %v1442
        %v1444 = vand.u32 %v257, 4294901760
        %v1445 = vsub.f32 %v257, %v1444
        %v1446 = vand.u32 %v1445, 4294901760
        %1447 = vmatprep.subr.mxu0 %v1446
        %v1448 = vand.u32 %v256, 4294901760
        %v1449 = vsub.f32 %v256, %v1448
        %v1450 = vand.u32 %v1449, 4294901760
        %1451 = vmatpush2.msra.mxu0 %v1450
        %v1452 = vand.u32 %v255, 4294901760
        %v1453 = vsub.f32 %v255, %v1452
        %v1454 = vand.u32 %v1453, 4294901760
        %1455 = vmatprep.subr.mxu0 %v1454
        %v1456 = vand.u32 %v254, 4294901760
        %v1457 = vsub.f32 %v254, %v1456
        %v1458 = vand.u32 %v1457, 4294901760
        %1459 = vmatpush2.msra.mxu0 %v1458
        %v1460 = vand.u32 %v253, 4294901760
        %v1461 = vsub.f32 %v253, %v1460
        %v1462 = vand.u32 %v1461, 4294901760
        %1463 = vmatprep.subr.mxu0 %v1462
        %v1464 = vand.u32 %v252, 4294901760
        %v1465 = vsub.f32 %v252, %v1464
        %v1466 = vand.u32 %v1465, 4294901760
        %1467 = vmatpush2.msra.mxu0 %v1466
        %v1468 = vand.u32 %v217, 4294901760
        %1469 = vmatprep.mubr.f32.mxu0 %v1468
        %v1470 = vand.u32 %v216, 4294901760
        %1471 = vmatmul.mubr.f32.gmra.mxu0 %v1470
        %v1472 = vpop.f32.mrf.mxu0
        %v1473 = vadd.f32 %v1196, %v1472
        %v1474 = vpop.f32.mrf.mxu0
        %v1475 = vadd.f32 %v1198, %v1474
        %v1476 = vand.u32 %v219, 4294901760
        %1477 = vmatprep.mubr.f32.mxu0 %v1476
        %v1478 = vand.u32 %v218, 4294901760
        %1479 = vmatmul.mubr.f32.gmra.mxu0 %v1478
        %v1480 = vpop.f32.mrf.mxu0
        %v1481 = vadd.f32 %v1208, %v1480
        %v1482 = vpop.f32.mrf.mxu0
        %v1483 = vadd.f32 %v1210, %v1482
        %1484 = vdwg.mxu0
        %v1485 = vand.u32 %v251, 4294901760
        %1486 = vmatprep.subr.mxu0 %v1485
        %v1487 = vand.u32 %v250, 4294901760
        %1488 = vmatpush1.msra.mxu0 %v1487
        %v1489 = vand.u32 %v249, 4294901760
        %1490 = vmatprep.subr.mxu0 %v1489
        %v1491 = vand.u32 %v248, 4294901760
        %1492 = vmatpush1.msra.mxu0 %v1491
        %v1493 = vand.u32 %v247, 4294901760
        %1494 = vmatprep.subr.mxu0 %v1493
        %v1495 = vand.u32 %v246, 4294901760
        %1496 = vmatpush1.msra.mxu0 %v1495
        %v1497 = vand.u32 %v245, 4294901760
        %1498 = vmatprep.subr.mxu0 %v1497
        %v1499 = vand.u32 %v244, 4294901760
        %1500 = vmatpush1.msra.mxu0 %v1499
        %v1501 = vand.u32 %v243, 4294901760
        %1502 = vmatprep.subr.mxu0 %v1501
        %v1503 = vand.u32 %v242, 4294901760
        %1504 = vmatpush1.msra.mxu0 %v1503
        %v1505 = vand.u32 %v241, 4294901760
        %1506 = vmatprep.subr.mxu0 %v1505
        %v1507 = vand.u32 %v240, 4294901760
        %1508 = vmatpush1.msra.mxu0 %v1507
        %v1509 = vand.u32 %v239, 4294901760
        %1510 = vmatprep.subr.mxu0 %v1509
        %v1511 = vand.u32 %v238, 4294901760
        %1512 = vmatpush1.msra.mxu0 %v1511
        %v1513 = vand.u32 %v237, 4294901760
        %1514 = vmatprep.subr.mxu0 %v1513
        %v1515 = vand.u32 %v236, 4294901760
        %1516 = vmatpush1.msra.mxu0 %v1515
        %v1517 = vand.u32 %v235, 4294901760
        %1518 = vmatprep.subr.mxu0 %v1517
        %v1519 = vand.u32 %v234, 4294901760
        %1520 = vmatpush1.msra.mxu0 %v1519
        %v1521 = vand.u32 %v233, 4294901760
        %1522 = vmatprep.subr.mxu0 %v1521
        %v1523 = vand.u32 %v232, 4294901760
        %1524 = vmatpush1.msra.mxu0 %v1523
        %v1525 = vand.u32 %v231, 4294901760
        %1526 = vmatprep.subr.mxu0 %v1525
        %v1527 = vand.u32 %v230, 4294901760
        %1528 = vmatpush1.msra.mxu0 %v1527
        %v1529 = vand.u32 %v229, 4294901760
        %1530 = vmatprep.subr.mxu0 %v1529
        %v1531 = vand.u32 %v228, 4294901760
        %1532 = vmatpush1.msra.mxu0 %v1531
        %v1533 = vand.u32 %v227, 4294901760
        %1534 = vmatprep.subr.mxu0 %v1533
        %v1535 = vand.u32 %v226, 4294901760
        %1536 = vmatpush1.msra.mxu0 %v1535
        %v1537 = vand.u32 %v225, 4294901760
        %1538 = vmatprep.subr.mxu0 %v1537
        %v1539 = vand.u32 %v224, 4294901760
        %1540 = vmatpush1.msra.mxu0 %v1539
        %v1541 = vand.u32 %v223, 4294901760
        %1542 = vmatprep.subr.mxu0 %v1541
        %v1543 = vand.u32 %v222, 4294901760
        %1544 = vmatpush1.msra.mxu0 %v1543
        %v1545 = vand.u32 %v221, 4294901760
        %1546 = vmatprep.subr.mxu0 %v1545
        %v1547 = vand.u32 %v220, 4294901760
        %1548 = vmatpush1.msra.mxu0 %v1547
        %v1549 = vand.u32 %v283, 4294901760
        %1550 = vmatprep.subr.mxu0 %v1549
        %v1551 = vand.u32 %v282, 4294901760
        %1552 = vmatpush2.msra.mxu0 %v1551
        %v1553 = vand.u32 %v281, 4294901760
        %1554 = vmatprep.subr.mxu0 %v1553
        %v1555 = vand.u32 %v280, 4294901760
        %1556 = vmatpush2.msra.mxu0 %v1555
        %v1557 = vand.u32 %v279, 4294901760
        %1558 = vmatprep.subr.mxu0 %v1557
        %v1559 = vand.u32 %v278, 4294901760
        %1560 = vmatpush2.msra.mxu0 %v1559
        %v1561 = vand.u32 %v277, 4294901760
        %1562 = vmatprep.subr.mxu0 %v1561
        %v1563 = vand.u32 %v276, 4294901760
        %1564 = vmatpush2.msra.mxu0 %v1563
        %v1565 = vand.u32 %v275, 4294901760
        %1566 = vmatprep.subr.mxu0 %v1565
        %v1567 = vand.u32 %v274, 4294901760
        %1568 = vmatpush2.msra.mxu0 %v1567
        %v1569 = vand.u32 %v273, 4294901760
        %1570 = vmatprep.subr.mxu0 %v1569
        %v1571 = vand.u32 %v272, 4294901760
        %1572 = vmatpush2.msra.mxu0 %v1571
        %v1573 = vand.u32 %v271, 4294901760
        %1574 = vmatprep.subr.mxu0 %v1573
        %v1575 = vand.u32 %v270, 4294901760
        %1576 = vmatpush2.msra.mxu0 %v1575
        %v1577 = vand.u32 %v269, 4294901760
        %1578 = vmatprep.subr.mxu0 %v1577
        %v1579 = vand.u32 %v268, 4294901760
        %1580 = vmatpush2.msra.mxu0 %v1579
        %v1581 = vand.u32 %v267, 4294901760
        %1582 = vmatprep.subr.mxu0 %v1581
        %v1583 = vand.u32 %v266, 4294901760
        %1584 = vmatpush2.msra.mxu0 %v1583
        %v1585 = vand.u32 %v265, 4294901760
        %1586 = vmatprep.subr.mxu0 %v1585
        %v1587 = vand.u32 %v264, 4294901760
        %1588 = vmatpush2.msra.mxu0 %v1587
        %v1589 = vand.u32 %v263, 4294901760
        %1590 = vmatprep.subr.mxu0 %v1589
        %v1591 = vand.u32 %v262, 4294901760
        %1592 = vmatpush2.msra.mxu0 %v1591
        %v1593 = vand.u32 %v261, 4294901760
        %1594 = vmatprep.subr.mxu0 %v1593
        %v1595 = vand.u32 %v260, 4294901760
        %1596 = vmatpush2.msra.mxu0 %v1595
        %v1597 = vand.u32 %v259, 4294901760
        %1598 = vmatprep.subr.mxu0 %v1597
        %v1599 = vand.u32 %v258, 4294901760
        %1600 = vmatpush2.msra.mxu0 %v1599
        %v1601 = vand.u32 %v257, 4294901760
        %1602 = vmatprep.subr.mxu0 %v1601
        %v1603 = vand.u32 %v256, 4294901760
        %1604 = vmatpush2.msra.mxu0 %v1603
        %v1605 = vand.u32 %v255, 4294901760
        %1606 = vmatprep.subr.mxu0 %v1605
        %v1607 = vand.u32 %v254, 4294901760
        %1608 = vmatpush2.msra.mxu0 %v1607
        %v1609 = vand.u32 %v253, 4294901760
        %1610 = vmatprep.subr.mxu0 %v1609
        %v1611 = vand.u32 %v252, 4294901760
        %1612 = vmatpush2.msra.mxu0 %v1611
        %v1613 = vand.u32 %v217, 4294901760
        %1614 = vmatprep.mubr.f32.mxu0 %v1613
        %v1615 = vand.u32 %v216, 4294901760
        %1616 = vmatmul.mubr.f32.gmra.mxu0 %v1615
        %v1617 = vpop.f32.mrf.mxu0
        %v1618 = vadd.f32 %v1473, %v1617
        %v1619 = vpop.f32.mrf.mxu0
        %v1620 = vadd.f32 %v1475, %v1619
        %v1621 = vand.u32 %v219, 4294901760
        %1622 = vmatprep.mubr.f32.mxu0 %v1621
        %v1623 = vand.u32 %v218, 4294901760
        %1624 = vmatmul.mubr.f32.gmra.mxu0 %v1623
        %v1625 = vpop.f32.mrf.mxu0
        %v1626 = vadd.f32 %v1481, %v1625
        %v1627 = vpop.f32.mrf.mxu0
        %v1628 = vadd.f32 %v1483, %v1627
        %1629 = vdwg.mxu0
        %v1630 = vld [vmem:[#allocation5] sm:$0xff]
        %v1631 = vld [vmem:[#allocation5 + $0x8] sm:$0xff]
        %vm1632 = vcmask 130048
        %v1634 = vsel %vm1632, %v1630, 0
        %v1637 = vsel %vm1632, %v1631, 0
        %1639 = vmatprep.subr.mxu0 0.0
        %1640 = vmatpush1.msra.mxu0 0.0
        %1641 = vmatprep.subr.mxu0 0.0
        %1642 = vmatpush1.msra.mxu0 0.0
        %1643 = vmatprep.subr.mxu0 0.0
        %1644 = vmatpush1.msra.mxu0 0.0
        %1645 = vmatprep.subr.mxu0 0.0
        %1646 = vmatpush1.msra.mxu0 0.0
        %1647 = vmatprep.subr.mxu0 0.0
        %1648 = vmatpush1.msra.mxu0 0.0
        %1649 = vmatprep.subr.mxu0 0.0
        %1650 = vmatpush1.msra.mxu0 0.0
        %1651 = vmatprep.subr.mxu0 0.0
        %1652 = vmatpush1.msra.mxu0 0.0
        %1653 = vmatprep.subr.mxu0 0.0
        %1654 = vmatpush1.msra.mxu0 0.0
        %1655 = vmatprep.subr.mxu0 0.0
        %1656 = vmatpush1.msra.mxu0 0.0
        %1657 = vmatprep.subr.mxu0 0.0
        %1658 = vmatpush1.msra.mxu0 0.0
        %1659 = vmatprep.subr.mxu0 0.0
        %1660 = vmatpush1.msra.mxu0 0.0
        %1661 = vmatprep.subr.mxu0 0.0
        %1662 = vmatpush1.msra.mxu0 0.0
        %1663 = vmatprep.subr.mxu0 0.0
        %1664 = vmatpush1.msra.mxu0 0.0
        %1665 = vmatprep.subr.mxu0 0.0
        %1666 = vmatpush1.msra.mxu0 0.0
        %v1667 = vand.u32 %v1628, 4294901760
        %1668 = vmatprep.subr.mxu0 %v1667
        %v1669 = vand.u32 %v1626, 4294901760
        %1670 = vmatpush1.msra.mxu0 %v1669
        %v1671 = vand.u32 %v1620, 4294901760
        %1672 = vmatprep.subr.mxu0 %v1671
        %v1673 = vand.u32 %v1618, 4294901760
        %1674 = vmatpush1.msra.mxu0 %v1673
        %1675 = vmatprep.subr.mxu0 0.0
        %1676 = vmatpush2.msra.mxu0 0.0
        %1677 = vmatprep.subr.mxu0 0.0
        %1678 = vmatpush2.msra.mxu0 0.0
        %1679 = vmatprep.subr.mxu0 0.0
        %1680 = vmatpush2.msra.mxu0 0.0
        %1681 = vmatprep.subr.mxu0 0.0
        %1682 = vmatpush2.msra.mxu0 0.0
        %1683 = vmatprep.subr.mxu0 0.0
        %1684 = vmatpush2.msra.mxu0 0.0
        %1685 = vmatprep.subr.mxu0 0.0
        %1686 = vmatpush2.msra.mxu0 0.0
        %1687 = vmatprep.subr.mxu0 0.0
        %1688 = vmatpush2.msra.mxu0 0.0
        %1689 = vmatprep.subr.mxu0 0.0
        %1690 = vmatpush2.msra.mxu0 0.0
        %1691 = vmatprep.subr.mxu0 0.0
        %1692 = vmatpush2.msra.mxu0 0.0
        %1693 = vmatprep.subr.mxu0 0.0
        %1694 = vmatpush2.msra.mxu0 0.0
        %1695 = vmatprep.subr.mxu0 0.0
        %1696 = vmatpush2.msra.mxu0 0.0
        %1697 = vmatprep.subr.mxu0 0.0
        %1698 = vmatpush2.msra.mxu0 0.0
        %1699 = vmatprep.subr.mxu0 0.0
        %1700 = vmatpush2.msra.mxu0 0.0
        %1701 = vmatprep.subr.mxu0 0.0
        %1702 = vmatpush2.msra.mxu0 0.0
        %1703 = vmatprep.subr.mxu0 0.0
        %1704 = vmatpush2.msra.mxu0 0.0
        %1705 = vmatprep.subr.mxu0 0.0
        %1706 = vmatpush2.msra.mxu0 0.0
        %1707 = vmatprep.mubr.f32.mxu0 0.0
        %v1708 = vand.u32 %v1634, 4294901760
        %v1709 = vsub.f32 %v1634, %v1708
        %v1710 = vand.u32 %v1709, 4294901760
        %v1711 = vsub.f32 %v1709, %v1710
        %v1712 = vand.u32 %v1711, 4294901760
        %1713 = vmatmul.mubr.f32.gmra.mxu0 %v1712
        %v1714 = vpop.f32.mrf.mxu0
        %v1715 = vadd.f32 0.0, %v1714
        %v1716 = vpop.f32.mrf.mxu0
        %v1717 = vadd.f32 0.0, %v1716
        %1718 = vmatprep.mubr.f32.mxu0 0.0
        %v1719 = vand.u32 %v1637, 4294901760
        %v1720 = vsub.f32 %v1637, %v1719
        %v1721 = vand.u32 %v1720, 4294901760
        %v1722 = vsub.f32 %v1720, %v1721
        %v1723 = vand.u32 %v1722, 4294901760
        %1724 = vmatmul.mubr.f32.gmra.mxu0 %v1723
        %v1725 = vpop.f32.mrf.mxu0
        %v1726 = vadd.f32 0.0, %v1725
        %v1727 = vpop.f32.mrf.mxu0
        %v1728 = vadd.f32 0.0, %v1727
        %1729 = vdwg.mxu0
        %1730 = vmatprep.subr.mxu0 0.0
        %1731 = vmatpush1.msra.mxu0 0.0
        %1732 = vmatprep.subr.mxu0 0.0
        %1733 = vmatpush1.msra.mxu0 0.0
        %1734 = vmatprep.subr.mxu0 0.0
        %1735 = vmatpush1.msra.mxu0 0.0
        %1736 = vmatprep.subr.mxu0 0.0
        %1737 = vmatpush1.msra.mxu0 0.0
        %1738 = vmatprep.subr.mxu0 0.0
        %1739 = vmatpush1.msra.mxu0 0.0
        %1740 = vmatprep.subr.mxu0 0.0
        %1741 = vmatpush1.msra.mxu0 0.0
        %1742 = vmatprep.subr.mxu0 0.0
        %1743 = vmatpush1.msra.mxu0 0.0
        %1744 = vmatprep.subr.mxu0 0.0
        %1745 = vmatpush1.msra.mxu0 0.0
        %1746 = vmatprep.subr.mxu0 0.0
        %1747 = vmatpush1.msra.mxu0 0.0
        %1748 = vmatprep.subr.mxu0 0.0
        %1749 = vmatpush1.msra.mxu0 0.0
        %1750 = vmatprep.subr.mxu0 0.0
        %1751 = vmatpush1.msra.mxu0 0.0
        %1752 = vmatprep.subr.mxu0 0.0
        %1753 = vmatpush1.msra.mxu0 0.0
        %1754 = vmatprep.subr.mxu0 0.0
        %1755 = vmatpush1.msra.mxu0 0.0
        %1756 = vmatprep.subr.mxu0 0.0
        %1757 = vmatpush1.msra.mxu0 0.0
        %v1758 = vand.u32 %v1628, 4294901760
        %v1759 = vsub.f32 %v1628, %v1758
        %v1760 = vand.u32 %v1759, 4294901760
        %v1761 = vsub.f32 %v1759, %v1760
        %v1762 = vand.u32 %v1761, 4294901760
        %1763 = vmatprep.subr.mxu0 %v1762
        %v1764 = vand.u32 %v1626, 4294901760
        %v1765 = vsub.f32 %v1626, %v1764
        %v1766 = vand.u32 %v1765, 4294901760
        %v1767 = vsub.f32 %v1765, %v1766
        %v1768 = vand.u32 %v1767, 4294901760
        %1769 = vmatpush1.msra.mxu0 %v1768
        %v1770 = vand.u32 %v1620, 4294901760
        %v1771 = vsub.f32 %v1620, %v1770
        %v1772 = vand.u32 %v1771, 4294901760
        %v1773 = vsub.f32 %v1771, %v1772
        %v1774 = vand.u32 %v1773, 4294901760
        %1775 = vmatprep.subr.mxu0 %v1774
        %v1776 = vand.u32 %v1618, 4294901760
        %v1777 = vsub.f32 %v1618, %v1776
        %v1778 = vand.u32 %v1777, 4294901760
        %v1779 = vsub.f32 %v1777, %v1778
        %v1780 = vand.u32 %v1779, 4294901760
        %1781 = vmatpush1.msra.mxu0 %v1780
        %1782 = vmatprep.subr.mxu0 0.0
        %1783 = vmatpush2.msra.mxu0 0.0
        %1784 = vmatprep.subr.mxu0 0.0
        %1785 = vmatpush2.msra.mxu0 0.0
        %1786 = vmatprep.subr.mxu0 0.0
        %1787 = vmatpush2.msra.mxu0 0.0
        %1788 = vmatprep.subr.mxu0 0.0
        %1789 = vmatpush2.msra.mxu0 0.0
        %1790 = vmatprep.subr.mxu0 0.0
        %1791 = vmatpush2.msra.mxu0 0.0
        %1792 = vmatprep.subr.mxu0 0.0
        %1793 = vmatpush2.msra.mxu0 0.0
        %1794 = vmatprep.subr.mxu0 0.0
        %1795 = vmatpush2.msra.mxu0 0.0
        %1796 = vmatprep.subr.mxu0 0.0
        %1797 = vmatpush2.msra.mxu0 0.0
        %1798 = vmatprep.subr.mxu0 0.0
        %1799 = vmatpush2.msra.mxu0 0.0
        %1800 = vmatprep.subr.mxu0 0.0
        %1801 = vmatpush2.msra.mxu0 0.0
        %1802 = vmatprep.subr.mxu0 0.0
        %1803 = vmatpush2.msra.mxu0 0.0
        %1804 = vmatprep.subr.mxu0 0.0
        %1805 = vmatpush2.msra.mxu0 0.0
        %1806 = vmatprep.subr.mxu0 0.0
        %1807 = vmatpush2.msra.mxu0 0.0
        %1808 = vmatprep.subr.mxu0 0.0
        %1809 = vmatpush2.msra.mxu0 0.0
        %1810 = vmatprep.subr.mxu0 0.0
        %1811 = vmatpush2.msra.mxu0 0.0
        %1812 = vmatprep.subr.mxu0 0.0
        %1813 = vmatpush2.msra.mxu0 0.0
        %1814 = vmatprep.mubr.f32.mxu0 0.0
        %v1815 = vand.u32 %v1634, 4294901760
        %1816 = vmatmul.mubr.f32.gmra.mxu0 %v1815
        %v1817 = vpop.f32.mrf.mxu0
        %v1818 = vadd.f32 %v1715, %v1817
        %v1819 = vpop.f32.mrf.mxu0
        %v1820 = vadd.f32 %v1717, %v1819
        %1821 = vmatprep.mubr.f32.mxu0 0.0
        %v1822 = vand.u32 %v1637, 4294901760
        %1823 = vmatmul.mubr.f32.gmra.mxu0 %v1822
        %v1824 = vpop.f32.mrf.mxu0
        %v1825 = vadd.f32 %v1726, %v1824
        %v1826 = vpop.f32.mrf.mxu0
        %v1827 = vadd.f32 %v1728, %v1826
        %1828 = vdwg.mxu0
        %1829 = vmatprep.subr.mxu0 0.0
        %1830 = vmatpush1.msra.mxu0 0.0
        %1831 = vmatprep.subr.mxu0 0.0
        %1832 = vmatpush1.msra.mxu0 0.0
        %1833 = vmatprep.subr.mxu0 0.0
        %1834 = vmatpush1.msra.mxu0 0.0
        %1835 = vmatprep.subr.mxu0 0.0
        %1836 = vmatpush1.msra.mxu0 0.0
        %1837 = vmatprep.subr.mxu0 0.0
        %1838 = vmatpush1.msra.mxu0 0.0
        %1839 = vmatprep.subr.mxu0 0.0
        %1840 = vmatpush1.msra.mxu0 0.0
        %1841 = vmatprep.subr.mxu0 0.0
        %1842 = vmatpush1.msra.mxu0 0.0
        %1843 = vmatprep.subr.mxu0 0.0
        %1844 = vmatpush1.msra.mxu0 0.0
        %1845 = vmatprep.subr.mxu0 0.0
        %1846 = vmatpush1.msra.mxu0 0.0
        %1847 = vmatprep.subr.mxu0 0.0
        %1848 = vmatpush1.msra.mxu0 0.0
        %1849 = vmatprep.subr.mxu0 0.0
        %1850 = vmatpush1.msra.mxu0 0.0
        %1851 = vmatprep.subr.mxu0 0.0
        %1852 = vmatpush1.msra.mxu0 0.0
        %1853 = vmatprep.subr.mxu0 0.0
        %1854 = vmatpush1.msra.mxu0 0.0
        %1855 = vmatprep.subr.mxu0 0.0
        %1856 = vmatpush1.msra.mxu0 0.0
        %v1857 = vand.u32 %v1628, 4294901760
        %v1858 = vsub.f32 %v1628, %v1857
        %1859 = vmatprep.subr.mxu0 %v1858
        %v1860 = vand.u32 %v1626, 4294901760
        %v1861 = vsub.f32 %v1626, %v1860
        %1862 = vmatpush1.msra.mxu0 %v1861
        %v1863 = vand.u32 %v1620, 4294901760
        %v1864 = vsub.f32 %v1620, %v1863
        %1865 = vmatprep.subr.mxu0 %v1864
        %v1866 = vand.u32 %v1618, 4294901760
        %v1867 = vsub.f32 %v1618, %v1866
        %1868 = vmatpush1.msra.mxu0 %v1867
        %1869 = vmatprep.subr.mxu0 0.0
        %1870 = vmatpush2.msra.mxu0 0.0
        %1871 = vmatprep.subr.mxu0 0.0
        %1872 = vmatpush2.msra.mxu0 0.0
        %1873 = vmatprep.subr.mxu0 0.0
        %1874 = vmatpush2.msra.mxu0 0.0
        %1875 = vmatprep.subr.mxu0 0.0
        %1876 = vmatpush2.msra.mxu0 0.0
        %1877 = vmatprep.subr.mxu0 0.0
        %1878 = vmatpush2.msra.mxu0 0.0
        %1879 = vmatprep.subr.mxu0 0.0
        %1880 = vmatpush2.msra.mxu0 0.0
        %1881 = vmatprep.subr.mxu0 0.0
        %1882 = vmatpush2.msra.mxu0 0.0
        %1883 = vmatprep.subr.mxu0 0.0
        %1884 = vmatpush2.msra.mxu0 0.0
        %1885 = vmatprep.subr.mxu0 0.0
        %1886 = vmatpush2.msra.mxu0 0.0
        %1887 = vmatprep.subr.mxu0 0.0
        %1888 = vmatpush2.msra.mxu0 0.0
        %1889 = vmatprep.subr.mxu0 0.0
        %1890 = vmatpush2.msra.mxu0 0.0
        %1891 = vmatprep.subr.mxu0 0.0
        %1892 = vmatpush2.msra.mxu0 0.0
        %1893 = vmatprep.subr.mxu0 0.0
        %1894 = vmatpush2.msra.mxu0 0.0
        %1895 = vmatprep.subr.mxu0 0.0
        %1896 = vmatpush2.msra.mxu0 0.0
        %1897 = vmatprep.subr.mxu0 0.0
        %1898 = vmatpush2.msra.mxu0 0.0
        %1899 = vmatprep.subr.mxu0 0.0
        %1900 = vmatpush2.msra.mxu0 0.0
        %1901 = vmatprep.mubr.f32.mxu0 0.0
        %v1902 = vand.u32 %v1634, 4294901760
        %v1903 = vsub.f32 %v1634, %v1902
        %1904 = vmatmul.mubr.f32.gmra.mxu0 %v1903
        %v1905 = vpop.f32.mrf.mxu0
        %v1906 = vadd.f32 %v1818, %v1905
        %v1907 = vpop.f32.mrf.mxu0
        %v1908 = vadd.f32 %v1820, %v1907
        %1909 = vmatprep.mubr.f32.mxu0 0.0
        %v1910 = vand.u32 %v1637, 4294901760
        %v1911 = vsub.f32 %v1637, %v1910
        %1912 = vmatmul.mubr.f32.gmra.mxu0 %v1911
        %v1913 = vpop.f32.mrf.mxu0
        %v1914 = vadd.f32 %v1825, %v1913
        %v1915 = vpop.f32.mrf.mxu0
        %v1916 = vadd.f32 %v1827, %v1915
        %1917 = vdwg.mxu0
        %1918 = vmatprep.subr.mxu0 0.0
        %1919 = vmatpush1.msra.mxu0 0.0
        %1920 = vmatprep.subr.mxu0 0.0
        %1921 = vmatpush1.msra.mxu0 0.0
        %1922 = vmatprep.subr.mxu0 0.0
        %1923 = vmatpush1.msra.mxu0 0.0
        %1924 = vmatprep.subr.mxu0 0.0
        %1925 = vmatpush1.msra.mxu0 0.0
        %1926 = vmatprep.subr.mxu0 0.0
        %1927 = vmatpush1.msra.mxu0 0.0
        %1928 = vmatprep.subr.mxu0 0.0
        %1929 = vmatpush1.msra.mxu0 0.0
        %1930 = vmatprep.subr.mxu0 0.0
        %1931 = vmatpush1.msra.mxu0 0.0
        %1932 = vmatprep.subr.mxu0 0.0
        %1933 = vmatpush1.msra.mxu0 0.0
        %1934 = vmatprep.subr.mxu0 0.0
        %1935 = vmatpush1.msra.mxu0 0.0
        %1936 = vmatprep.subr.mxu0 0.0
        %1937 = vmatpush1.msra.mxu0 0.0
        %1938 = vmatprep.subr.mxu0 0.0
        %1939 = vmatpush1.msra.mxu0 0.0
        %1940 = vmatprep.subr.mxu0 0.0
        %1941 = vmatpush1.msra.mxu0 0.0
        %1942 = vmatprep.subr.mxu0 0.0
        %1943 = vmatpush1.msra.mxu0 0.0
        %1944 = vmatprep.subr.mxu0 0.0
        %1945 = vmatpush1.msra.mxu0 0.0
        %v1946 = vand.u32 %v1628, 4294901760
        %1947 = vmatprep.subr.mxu0 %v1946
        %v1948 = vand.u32 %v1626, 4294901760
        %1949 = vmatpush1.msra.mxu0 %v1948
        %v1950 = vand.u32 %v1620, 4294901760
        %1951 = vmatprep.subr.mxu0 %v1950
        %v1952 = vand.u32 %v1618, 4294901760
        %1953 = vmatpush1.msra.mxu0 %v1952
        %1954 = vmatprep.subr.mxu0 0.0
        %1955 = vmatpush2.msra.mxu0 0.0
        %1956 = vmatprep.subr.mxu0 0.0
        %1957 = vmatpush2.msra.mxu0 0.0
        %1958 = vmatprep.subr.mxu0 0.0
        %1959 = vmatpush2.msra.mxu0 0.0
        %1960 = vmatprep.subr.mxu0 0.0
        %1961 = vmatpush2.msra.mxu0 0.0
        %1962 = vmatprep.subr.mxu0 0.0
        %1963 = vmatpush2.msra.mxu0 0.0
        %1964 = vmatprep.subr.mxu0 0.0
        %1965 = vmatpush2.msra.mxu0 0.0
        %1966 = vmatprep.subr.mxu0 0.0
        %1967 = vmatpush2.msra.mxu0 0.0
        %1968 = vmatprep.subr.mxu0 0.0
        %1969 = vmatpush2.msra.mxu0 0.0
        %1970 = vmatprep.subr.mxu0 0.0
        %1971 = vmatpush2.msra.mxu0 0.0
        %1972 = vmatprep.subr.mxu0 0.0
        %1973 = vmatpush2.msra.mxu0 0.0
        %1974 = vmatprep.subr.mxu0 0.0
        %1975 = vmatpush2.msra.mxu0 0.0
        %1976 = vmatprep.subr.mxu0 0.0
        %1977 = vmatpush2.msra.mxu0 0.0
        %1978 = vmatprep.subr.mxu0 0.0
        %1979 = vmatpush2.msra.mxu0 0.0
        %1980 = vmatprep.subr.mxu0 0.0
        %1981 = vmatpush2.msra.mxu0 0.0
        %1982 = vmatprep.subr.mxu0 0.0
        %1983 = vmatpush2.msra.mxu0 0.0
        %1984 = vmatprep.subr.mxu0 0.0
        %1985 = vmatpush2.msra.mxu0 0.0
        %1986 = vmatprep.mubr.f32.mxu0 0.0
        %v1987 = vand.u32 %v1634, 4294901760
        %v1988 = vsub.f32 %v1634, %v1987
        %v1989 = vand.u32 %v1988, 4294901760
        %1990 = vmatmul.mubr.f32.gmra.mxu0 %v1989
        %v1991 = vpop.f32.mrf.mxu0
        %v1992 = vadd.f32 %v1906, %v1991
        %v1993 = vpop.f32.mrf.mxu0
        %v1994 = vadd.f32 %v1908, %v1993
        %1995 = vmatprep.mubr.f32.mxu0 0.0
        %v1996 = vand.u32 %v1637, 4294901760
        %v1997 = vsub.f32 %v1637, %v1996
        %v1998 = vand.u32 %v1997, 4294901760
        %1999 = vmatmul.mubr.f32.gmra.mxu0 %v1998
        %v2000 = vpop.f32.mrf.mxu0
        %v2001 = vadd.f32 %v1914, %v2000
        %v2002 = vpop.f32.mrf.mxu0
        %v2003 = vadd.f32 %v1916, %v2002
        %2004 = vdwg.mxu0
        %2005 = vmatprep.subr.mxu0 0.0
        %2006 = vmatpush1.msra.mxu0 0.0
        %2007 = vmatprep.subr.mxu0 0.0
        %2008 = vmatpush1.msra.mxu0 0.0
        %2009 = vmatprep.subr.mxu0 0.0
        %2010 = vmatpush1.msra.mxu0 0.0
        %2011 = vmatprep.subr.mxu0 0.0
        %2012 = vmatpush1.msra.mxu0 0.0
        %2013 = vmatprep.subr.mxu0 0.0
        %2014 = vmatpush1.msra.mxu0 0.0
        %2015 = vmatprep.subr.mxu0 0.0
        %2016 = vmatpush1.msra.mxu0 0.0
        %2017 = vmatprep.subr.mxu0 0.0
        %2018 = vmatpush1.msra.mxu0 0.0
        %2019 = vmatprep.subr.mxu0 0.0
        %2020 = vmatpush1.msra.mxu0 0.0
        %2021 = vmatprep.subr.mxu0 0.0
        %2022 = vmatpush1.msra.mxu0 0.0
        %2023 = vmatprep.subr.mxu0 0.0
        %2024 = vmatpush1.msra.mxu0 0.0
        %2025 = vmatprep.subr.mxu0 0.0
        %2026 = vmatpush1.msra.mxu0 0.0
        %2027 = vmatprep.subr.mxu0 0.0
        %2028 = vmatpush1.msra.mxu0 0.0
        %2029 = vmatprep.subr.mxu0 0.0
        %2030 = vmatpush1.msra.mxu0 0.0
        %2031 = vmatprep.subr.mxu0 0.0
        %2032 = vmatpush1.msra.mxu0 0.0
        %v2033 = vand.u32 %v1628, 4294901760
        %v2034 = vsub.f32 %v1628, %v2033
        %v2035 = vand.u32 %v2034, 4294901760
        %2036 = vmatprep.subr.mxu0 %v2035
        %v2037 = vand.u32 %v1626, 4294901760
        %v2038 = vsub.f32 %v1626, %v2037
        %v2039 = vand.u32 %v2038, 4294901760
        %2040 = vmatpush1.msra.mxu0 %v2039
        %v2041 = vand.u32 %v1620, 4294901760
        %v2042 = vsub.f32 %v1620, %v2041
        %v2043 = vand.u32 %v2042, 4294901760
        %2044 = vmatprep.subr.mxu0 %v2043
        %v2045 = vand.u32 %v1618, 4294901760
        %v2046 = vsub.f32 %v1618, %v2045
        %v2047 = vand.u32 %v2046, 4294901760
        %2048 = vmatpush1.msra.mxu0 %v2047
        %2049 = vmatprep.subr.mxu0 0.0
        %2050 = vmatpush2.msra.mxu0 0.0
        %2051 = vmatprep.subr.mxu0 0.0
        %2052 = vmatpush2.msra.mxu0 0.0
        %2053 = vmatprep.subr.mxu0 0.0
        %2054 = vmatpush2.msra.mxu0 0.0
        %2055 = vmatprep.subr.mxu0 0.0
        %2056 = vmatpush2.msra.mxu0 0.0
        %2057 = vmatprep.subr.mxu0 0.0
        %2058 = vmatpush2.msra.mxu0 0.0
        %2059 = vmatprep.subr.mxu0 0.0
        %2060 = vmatpush2.msra.mxu0 0.0
        %2061 = vmatprep.subr.mxu0 0.0
        %2062 = vmatpush2.msra.mxu0 0.0
        %2063 = vmatprep.subr.mxu0 0.0
        %2064 = vmatpush2.msra.mxu0 0.0
        %2065 = vmatprep.subr.mxu0 0.0
        %2066 = vmatpush2.msra.mxu0 0.0
        %2067 = vmatprep.subr.mxu0 0.0
        %2068 = vmatpush2.msra.mxu0 0.0
        %2069 = vmatprep.subr.mxu0 0.0
        %2070 = vmatpush2.msra.mxu0 0.0
        %2071 = vmatprep.subr.mxu0 0.0
        %2072 = vmatpush2.msra.mxu0 0.0
        %2073 = vmatprep.subr.mxu0 0.0
        %2074 = vmatpush2.msra.mxu0 0.0
        %2075 = vmatprep.subr.mxu0 0.0
        %2076 = vmatpush2.msra.mxu0 0.0
        %2077 = vmatprep.subr.mxu0 0.0
        %2078 = vmatpush2.msra.mxu0 0.0
        %2079 = vmatprep.subr.mxu0 0.0
        %2080 = vmatpush2.msra.mxu0 0.0
        %2081 = vmatprep.mubr.f32.mxu0 0.0
        %v2082 = vand.u32 %v1634, 4294901760
        %2083 = vmatmul.mubr.f32.gmra.mxu0 %v2082
        %v2084 = vpop.f32.mrf.mxu0
        %v2085 = vadd.f32 %v1992, %v2084
        %v2086 = vpop.f32.mrf.mxu0
        %v2087 = vadd.f32 %v1994, %v2086
        %2088 = vmatprep.mubr.f32.mxu0 0.0
        %v2089 = vand.u32 %v1637, 4294901760
        %2090 = vmatmul.mubr.f32.gmra.mxu0 %v2089
        %v2091 = vpop.f32.mrf.mxu0
        %v2092 = vadd.f32 %v2001, %v2091
        %v2093 = vpop.f32.mrf.mxu0
        %v2094 = vadd.f32 %v2003, %v2093
        %2095 = vdwg.mxu0
        %2096 = vmatprep.subr.mxu0 0.0
        %2097 = vmatpush1.msra.mxu0 0.0
        %2098 = vmatprep.subr.mxu0 0.0
        %2099 = vmatpush1.msra.mxu0 0.0
        %2100 = vmatprep.subr.mxu0 0.0
        %2101 = vmatpush1.msra.mxu0 0.0
        %2102 = vmatprep.subr.mxu0 0.0
        %2103 = vmatpush1.msra.mxu0 0.0
        %2104 = vmatprep.subr.mxu0 0.0
        %2105 = vmatpush1.msra.mxu0 0.0
        %2106 = vmatprep.subr.mxu0 0.0
        %2107 = vmatpush1.msra.mxu0 0.0
        %2108 = vmatprep.subr.mxu0 0.0
        %2109 = vmatpush1.msra.mxu0 0.0
        %2110 = vmatprep.subr.mxu0 0.0
        %2111 = vmatpush1.msra.mxu0 0.0
        %2112 = vmatprep.subr.mxu0 0.0
        %2113 = vmatpush1.msra.mxu0 0.0
        %2114 = vmatprep.subr.mxu0 0.0
        %2115 = vmatpush1.msra.mxu0 0.0
        %2116 = vmatprep.subr.mxu0 0.0
        %2117 = vmatpush1.msra.mxu0 0.0
        %2118 = vmatprep.subr.mxu0 0.0
        %2119 = vmatpush1.msra.mxu0 0.0
        %2120 = vmatprep.subr.mxu0 0.0
        %2121 = vmatpush1.msra.mxu0 0.0
        %2122 = vmatprep.subr.mxu0 0.0
        %2123 = vmatpush1.msra.mxu0 0.0
        %v2124 = vand.u32 %v1628, 4294901760
        %2125 = vmatprep.subr.mxu0 %v2124
        %v2126 = vand.u32 %v1626, 4294901760
        %2127 = vmatpush1.msra.mxu0 %v2126
        %v2128 = vand.u32 %v1620, 4294901760
        %2129 = vmatprep.subr.mxu0 %v2128
        %v2130 = vand.u32 %v1618, 4294901760
        %2131 = vmatpush1.msra.mxu0 %v2130
        %2132 = vmatprep.subr.mxu0 0.0
        %2133 = vmatpush2.msra.mxu0 0.0
        %2134 = vmatprep.subr.mxu0 0.0
        %2135 = vmatpush2.msra.mxu0 0.0
        %2136 = vmatprep.subr.mxu0 0.0
        %2137 = vmatpush2.msra.mxu0 0.0
        %2138 = vmatprep.subr.mxu0 0.0
        %2139 = vmatpush2.msra.mxu0 0.0
        %2140 = vmatprep.subr.mxu0 0.0
        %2141 = vmatpush2.msra.mxu0 0.0
        %2142 = vmatprep.subr.mxu0 0.0
        %2143 = vmatpush2.msra.mxu0 0.0
        %2144 = vmatprep.subr.mxu0 0.0
        %2145 = vmatpush2.msra.mxu0 0.0
        %2146 = vmatprep.subr.mxu0 0.0
        %2147 = vmatpush2.msra.mxu0 0.0
        %2148 = vmatprep.subr.mxu0 0.0
        %2149 = vmatpush2.msra.mxu0 0.0
        %2150 = vmatprep.subr.mxu0 0.0
        %2151 = vmatpush2.msra.mxu0 0.0
        %2152 = vmatprep.subr.mxu0 0.0
        %2153 = vmatpush2.msra.mxu0 0.0
        %2154 = vmatprep.subr.mxu0 0.0
        %2155 = vmatpush2.msra.mxu0 0.0
        %2156 = vmatprep.subr.mxu0 0.0
        %2157 = vmatpush2.msra.mxu0 0.0
        %2158 = vmatprep.subr.mxu0 0.0
        %2159 = vmatpush2.msra.mxu0 0.0
        %2160 = vmatprep.subr.mxu0 0.0
        %2161 = vmatpush2.msra.mxu0 0.0
        %2162 = vmatprep.subr.mxu0 0.0
        %2163 = vmatpush2.msra.mxu0 0.0
        %2164 = vmatprep.mubr.f32.mxu0 0.0
        %v2165 = vand.u32 %v1634, 4294901760
        %2166 = vmatmul.mubr.f32.gmra.mxu0 %v2165
        %v2167 = vpop.f32.mrf.mxu0
        %v2168 = vadd.f32 %v2085, %v2167
        %v2169 = vpop.f32.mrf.mxu0
        %v2170 = vadd.f32 %v2087, %v2169
        %2171 = vmatprep.mubr.f32.mxu0 0.0
        %v2172 = vand.u32 %v1637, 4294901760
        %2173 = vmatmul.mubr.f32.gmra.mxu0 %v2172
        %v2174 = vpop.f32.mrf.mxu0
        %v2175 = vadd.f32 %v2092, %v2174
        %v2176 = vpop.f32.mrf.mxu0
        %v2177 = vadd.f32 %v2094, %v2176
        %2178 = vdwg.mxu0
        %2179 = vst [vmem:[%s215] sm:$0xff] %v2168
        %2180 = vst [vmem:[%s215 + $0x8] sm:$0xff] %v2170
        %2181 = vst [vmem:[%s215 + $0x10] sm:$0xff] %v2175
        %2182 = vst [vmem:[%s215 + $0x18] sm:$0xff] %v2177
        %s2183 = sand.u32 %s95, 1
        %s2184 = scalar_lea.sflag [#allocation4], %s2183
        %s2185 = sand.u32 %s95, 1
        %s2186 = smul.addr %s2185, 32
        %s2187 = scalar_lea.vmem [#allocation8], %s2186
        // Predicated region
        $region45: #{tpu_custom_call.1} parent=31 // pred_check
          %p2188 = pneg %p105
        $region46: #{tpu_custom_call.1} parent=31 // pred_check_branch
          %2190 = sbr.rel (%p2188) target = $region48
        $region47: #{tpu_custom_call.1} parent=31 // pred_region
          %s2192 = ssub.s32 512, 512
          %2193 = vsyncadd %s2184, %s2192
          %s2194 = smul.addr %s19, 4
          %s2195 = smul.addr %s2194, 128
          %s2196 = scalar_lea.hbm %s3, %s2195
          %s2197 = sshll.u32 %s2187, 4
          %s2198 = int_to_ptr.vmem [resolvable:$true] %s2197
          %2203 = dma.vmem_to_hbm [thread:$0]  %s2198, 512, %s2196, %s2184, 256, 256, 16
        $region48: #{tpu_custom_call.1} parent=31 // pred_fallthru
          _
      $region32: #{tpu_custom_call.1} parent=5 // pred_fallthru
        _
      %p2204 = scmp.le.s32.totalorder 2, %s14
      // Predicated region
      $region49: #{tpu_custom_call.1} parent=5 // pred_check
        %p2205 = pneg %p2204
      $region50: #{tpu_custom_call.1} parent=5 // pred_check_branch
        %2207 = sbr.rel (%p2205) target = $region52
      $region51: #{tpu_custom_call.1} parent=5 // pred_region
        %s2208 = ssub.s32 %s14, 2
        // Predicated region
        $region53: #{tpu_custom_call.1} parent=51 // pred_check
          %p2209 = pneg %p111
        $region54: #{tpu_custom_call.1} parent=51 // pred_check_branch
          %2211 = sbr.rel (%p2209) target = $region56
        $region55: #{tpu_custom_call.1} parent=51 // pred_region
          %s2212 = sand.u32 %s96, 1
          %s2213 = scalar_lea.sflag [#allocation4], %s2212
          %s2214 = sand.u32 %s96, 1
          %s2215 = smul.addr %s2214, 32
          %s2216 = scalar_lea.vmem [#allocation8], %s2215
          %2217 = dma.done %s2213, 512
        $region56: #{tpu_custom_call.1} parent=51 // pred_fallthru
          _
      $region52: #{tpu_custom_call.1} parent=5 // pred_fallthru
        _
    $region6: #{tpu_custom_call.1} parent=1 // loop_footer
      %s18 = sadd.s32 1, %s14
    $region7: #{tpu_custom_call.1} parent=1 // loop_footer_branch
      %13 = sbr.rel target = $region3
    $region8: #{tpu_custom_call.1} parent=1 // loop_exit
      _
    %2218 = vsyncpa [#allocation3], 1
    %s2219 = scalar_lea.sflag [#allocation3], 1
    %2220 = vsyncpa %s2219, 1
    %2221 = vsyncpa [#allocation6], 1
    %2222 = vsyncpa [#allocation4], 1
    %s2223 = scalar_lea.sflag [#allocation4], 1
    %2224 = vsyncpa %s2223, 1

</llo_original>
